<compile_context>
chip_gen: v5e
topology: v5e:2x2
jax: 0.10.0
libtpu: 0.0.40
codegen_flags: <defaults>
</compile_context>

<pallas_src>
import functools

import jax
import jax.numpy as jnp
from jax.experimental import pallas as pl
from jax.experimental.pallas import tpu as pltpu

LN_EPS = 1e-5


def _make_avi_kernel(T, B, E, nhead, eps):
    Dh = E // nhead
    BT = B * T
    T2 = 2 * T

    def kernel(v_ref, a_ref, mem_ref, wq_ref, bq_ref, wkv_ref, bkv_ref,
               wo_ref, bo_ref, g_ref, beta_ref, o_ref):
        v = v_ref[...]                         # f32 [BT, E]  video (batch-major rows)
        a = a_ref[...]                         # f32 [BT, E]  audio
        glob = v * a                           # f32 gate: attention query AND residual

        # Q projection (bf16 MXU inputs, f32 accumulation). The 1/sqrt(Dh)
        # softmax scale is pre-folded into wq / bq in the wrapper.
        q = jnp.dot(glob.astype(jnp.bfloat16), wq_ref[...],
                    preferred_element_type=jnp.float32) + bq_ref[...]      # [BT, E]

        # Fused K|V projection of the pre-interleaved memory (rows per batch:
        # [audio_b ; video_b]) -- one wide bf16 matmul, no in-kernel concat.
        kv = jnp.dot(mem_ref[...], wkv_ref[...],
                     preferred_element_type=jnp.float32) + bkv_ref[...]    # [2BT, 2E]

        # Per-(batch, head) attention, statically unrolled (B*nhead tiny matmuls).
        batch_outs = []
        for b in range(B):
            r0 = b * T
            m0 = b * T2
            kv_b = kv[m0:m0 + T2, :]                  # [2T, 2E]  lazy per-batch slice
            kT_b = jnp.transpose(kv_b[:, :E])         # [E, 2T]   one K transpose / batch
            v_b = kv_b[:, E:]                         # [2T, E]
            q_b = q[r0:r0 + T, :]                     # [T, E]
            head_outs = []
            for h in range(nhead):
                c0 = h * Dh
                s = jnp.dot(q_b[:, c0:c0 + Dh], kT_b[c0:c0 + Dh, :],
                            preferred_element_type=jnp.float32)            # [T, 2T]
                s = s - jnp.max(s, axis=-1, keepdims=True)
                p = jnp.exp(s)
                p = p * pl.reciprocal(jnp.sum(p, axis=-1, keepdims=True),
                                      approx=True)
                head_outs.append(
                    jnp.dot(p, v_b[:, c0:c0 + Dh],
                            preferred_element_type=jnp.float32))           # [T, Dh]
            batch_outs.append(jnp.concatenate(head_outs, axis=-1))         # [T, E]
        attn = jnp.concatenate(batch_outs, axis=0)                         # [BT, E]

        # Output projection + residual + LayerNorm epilogue (all in VMEM, f32).
        mid = jnp.dot(attn.astype(jnp.bfloat16), wo_ref[...],
                      preferred_element_type=jnp.float32) + bo_ref[...]
        x = glob + mid
        mu = jnp.mean(x, axis=-1, keepdims=True)
        var = jnp.mean((x - mu) ** 2, axis=-1, keepdims=True)
        inv = jax.lax.rsqrt(var + eps)
        o_ref[...] = ((x - mu) * inv) * g_ref[...] + beta_ref[...]

    return kernel


def audio_video_inter_forward(params, video_feat, audio_feat, *, nhead=4):
    """video_feat / audio_feat: [T, B, E] (torch seq-first). Returns [T, B, E]."""
    T, B, E = video_feat.shape
    BT = B * T
    Dh = E // nhead
    scale = 1.0 / float(Dh) ** 0.5

    # Batch-major, lane-dense 2-D activations for the kernel (tiny XLA reshapes).
    v_bm = jnp.swapaxes(video_feat, 0, 1)                # [B, T, E]
    a_bm = jnp.swapaxes(audio_feat, 0, 1)                # [B, T, E]
    v2 = v_bm.reshape(BT, E)
    a2 = a_bm.reshape(BT, E)
    # Pre-interleaved memory: per-batch contiguous rows [audio_b ; video_b].
    mem = jnp.concatenate([a_bm, v_bm], axis=1).reshape(B * 2 * T, E)
    mem = mem.astype(jnp.bfloat16)

    # bf16 weights (halved DMA bytes, native MXU path); scale folded into Q proj.
    wq = (params["wq"] * scale).astype(jnp.bfloat16)
    bq = (params["bq"] * scale).reshape(1, E).astype(jnp.float32)
    wkv = params["wkv"].astype(jnp.bfloat16)
    bkv = params["bkv"].reshape(1, 2 * E).astype(jnp.float32)
    wo = params["wo"].astype(jnp.bfloat16)
    bo = params["bo"].reshape(1, E).astype(jnp.float32)
    gamma = params["ln_g"].reshape(1, E)
    beta = params["ln_b"].reshape(1, E)

    def full(shape):
        return pl.BlockSpec(shape, lambda i: (0,) * len(shape))

    out2 = pl.pallas_call(
        _make_avi_kernel(T, B, E, nhead, LN_EPS),
        out_shape=jax.ShapeDtypeStruct((BT, E), jnp.float32),
        grid=(1,),
        in_specs=[
            full((BT, E)), full((BT, E)),            # video, audio (f32)
            full((2 * BT, E)),                       # interleaved memory (bf16)
            full((E, E)), full((1, E)),              # Wq (bf16, scaled), bq
            full((E, 2 * E)), full((1, 2 * E)),      # W[k|v] (bf16), b[k|v]
            full((E, E)), full((1, E)),              # Wo (bf16), bo
            full((1, E)), full((1, E)),              # LN gamma, beta
        ],
        out_specs=full((BT, E)),
        compiler_params=pltpu.CompilerParams(
            dimension_semantics=("arbitrary",)),
    )(v2, a2, mem, wq, bq, wkv, bkv, wo, bo, gamma, beta)

    return jnp.swapaxes(out2.reshape(B, T, E), 0, 1)


def init_params(key, d_model):
    """Synthetic weights matching nn.MultiheadAttention + LayerNorm shapes,
    stored in the (transposed) layout the kernel consumes, in f32."""
    ks = jax.random.split(key, 4)
    s = 0.05
    w_in = jax.random.normal(ks[0], (3 * d_model, d_model), jnp.float32) * s
    b_in = jax.random.normal(ks[1], (3 * d_model,), jnp.float32) * s
    w_out = jax.random.normal(ks[2], (d_model, d_model), jnp.float32) * s
    b_out = jax.random.normal(ks[3], (d_model,), jnp.float32) * s
    return {
        "wq": jnp.transpose(w_in[:d_model]),        # [E, E]
        "bq": b_in[:d_model],
        "wkv": jnp.transpose(w_in[d_model:]),       # [E, 2E]  (K then V)
        "bkv": b_in[d_model:],
        "wo": jnp.transpose(w_out),                 # [E, E]
        "bo": b_out,
        "ln_g": jnp.ones((d_model,), jnp.float32),
        "ln_b": jnp.zeros((d_model,), jnp.float32),
    }


def _reference(params, video_feat, audio_feat, *, nhead=4):
    """Pure-JAX f32 reference of the PyTorch eval-mode forward."""
    T, B, E = video_feat.shape
    Dh = E // nhead
    glob = video_feat * audio_feat
    mem = jnp.concatenate([audio_feat, video_feat], axis=0)          # [2T, B, E]
    q = jnp.einsum("tbe,ef->tbf", glob, params["wq"]) + params["bq"]
    kv = jnp.einsum("sbe,ef->sbf", mem, params["wkv"]) + params["bkv"]
    k, v = kv[..., :E], kv[..., E:]
    qh = q.reshape(T, B, nhead, Dh)
    kh = k.reshape(2 * T, B, nhead, Dh)
    vh = v.reshape(2 * T, B, nhead, Dh)
    s = jnp.einsum("tbhd,sbhd->bhts", qh, kh) / jnp.sqrt(Dh)
    p = jax.nn.softmax(s, axis=-1)
    o = jnp.einsum("bhts,sbhd->tbhd", p, vh).reshape(T, B, E)
    mid = jnp.einsum("tbe,ef->tbf", o, params["wo"]) + params["bo"]
    x = glob + mid
    mu = x.mean(-1, keepdims=True)
    var = ((x - mu) ** 2).mean(-1, keepdims=True)
    return (x - mu) * jax.lax.rsqrt(var + LN_EPS) * params["ln_g"] + params["ln_b"]


if __name__ == "__main__":
    key = jax.random.PRNGKey(0)
    kp, kvid, kaud = jax.random.split(key, 3)
    T, B, E, H = 8, 2, 256, 4
    video = jax.random.normal(kvid, (T, B, E), jnp.float32)
    audio = jax.random.normal(kaud, (T, B, E), jnp.float32)
    params = init_params(kp, E)

    fwd = jax.jit(functools.partial(audio_video_inter_forward, params, nhead=H))
    out = fwd(video, audio)
    jax.block_until_ready(out)

    assert out.shape == (T, B, E)
    assert bool(jnp.all(jnp.isfinite(out)))

    # Loose tolerance: bf16 weights + approx reciprocal give ~1e-2 rel drift.
    ref = _reference(params, video, audio, nhead=H)
    err = float(jnp.max(jnp.abs(out - ref)))
    assert err < 2e-1, f"max abs error vs f32 reference too large: {err}"
    print("KERNEL_OK")
</pallas_src>

<mosaic_0001>
module attributes {stable_mosaic.version = 11 : i64} {
  func.func @kernel(%arg0: i32, %arg1: memref<16x256xf32, #tpu.memory_space<vmem>>, %arg2: memref<16x256xf32, #tpu.memory_space<vmem>>, %arg3: memref<32x256xbf16, #tpu.memory_space<vmem>>, %arg4: memref<256x256xbf16, #tpu.memory_space<vmem>>, %arg5: memref<1x256xf32, #tpu.memory_space<vmem>>, %arg6: memref<256x512xbf16, #tpu.memory_space<vmem>>, %arg7: memref<1x512xf32, #tpu.memory_space<vmem>>, %arg8: memref<256x256xbf16, #tpu.memory_space<vmem>>, %arg9: memref<1x256xf32, #tpu.memory_space<vmem>>, %arg10: memref<1x256xf32, #tpu.memory_space<vmem>>, %arg11: memref<1x256xf32, #tpu.memory_space<vmem>>, %arg12: memref<16x256xf32, #tpu.memory_space<vmem>>) attributes {dimension_semantics = [#tpu.dimension_semantics<arbitrary>], iteration_bounds = array<i64: 1>, scalar_prefetch = 0 : i64, scratch_operands = 0 : i64, tpu.core_type = #tpu.core_type<tc>, window_params = [{pipeline_mode = #tpu.pipeline_mode<synchronous>, transform_indices = @transform_0, window_bounds = array<i64: 16, 256>}, {pipeline_mode = #tpu.pipeline_mode<synchronous>, transform_indices = @transform_1, window_bounds = array<i64: 16, 256>}, {pipeline_mode = #tpu.pipeline_mode<synchronous>, transform_indices = @transform_2, window_bounds = array<i64: 32, 256>}, {pipeline_mode = #tpu.pipeline_mode<synchronous>, transform_indices = @transform_3, window_bounds = array<i64: 256, 256>}, {pipeline_mode = #tpu.pipeline_mode<synchronous>, transform_indices = @transform_4, window_bounds = array<i64: 1, 256>}, {pipeline_mode = #tpu.pipeline_mode<synchronous>, transform_indices = @transform_5, window_bounds = array<i64: 256, 512>}, {pipeline_mode = #tpu.pipeline_mode<synchronous>, transform_indices = @transform_6, window_bounds = array<i64: 1, 512>}, {pipeline_mode = #tpu.pipeline_mode<synchronous>, transform_indices = @transform_7, window_bounds = array<i64: 256, 256>}, {pipeline_mode = #tpu.pipeline_mode<synchronous>, transform_indices = @transform_8, window_bounds = array<i64: 1, 256>}, {pipeline_mode = #tpu.pipeline_mode<synchronous>, transform_indices = @transform_9, window_bounds = array<i64: 1, 256>}, {pipeline_mode = #tpu.pipeline_mode<synchronous>, transform_indices = @transform_10, window_bounds = array<i64: 1, 256>}, {pipeline_mode = #tpu.pipeline_mode<synchronous>, transform_indices = @transform_11, window_bounds = array<i64: 16, 256>}]} {
    %c0 = arith.constant 0 : index
    %c0_0 = arith.constant 0 : index
    %0 = vector.load %arg1[%c0, %c0_0] : memref<16x256xf32, #tpu.memory_space<vmem>>, vector<16x256xf32>
    %c0_1 = arith.constant 0 : index
    %c0_2 = arith.constant 0 : index
    %1 = vector.load %arg2[%c0_1, %c0_2] : memref<16x256xf32, #tpu.memory_space<vmem>>, vector<16x256xf32>
    %2 = arith.mulf %0, %1 : vector<16x256xf32>
    %3 = arith.truncf %2 : vector<16x256xf32> to vector<16x256xbf16>
    %c0_3 = arith.constant 0 : index
    %c0_4 = arith.constant 0 : index
    %4 = vector.load %arg4[%c0_3, %c0_4] : memref<256x256xbf16, #tpu.memory_space<vmem>>, vector<256x256xbf16>
    %cst = arith.constant dense<0.000000e+00> : vector<16x256xf32>
    %5 = tpu.matmul %3, %4, %cst {dimension_numbers = #tpu.dot_dimension_numbers<[1], [0], [0], [1], [0, 0, 1, 1], [], []>} : vector<16x256xbf16>, vector<256x256xbf16>, vector<16x256xf32> -> vector<16x256xf32>
    %c0_5 = arith.constant 0 : index
    %c0_6 = arith.constant 0 : index
    %6 = vector.load %arg5[%c0_5, %c0_6] : memref<1x256xf32, #tpu.memory_space<vmem>>, vector<1x256xf32>
    %7 = vector.broadcast %6 : vector<1x256xf32> to vector<16x256xf32>
    %8 = arith.addf %5, %7 : vector<16x256xf32>
    %c0_7 = arith.constant 0 : index
    %c0_8 = arith.constant 0 : index
    %9 = vector.load %arg3[%c0_7, %c0_8] : memref<32x256xbf16, #tpu.memory_space<vmem>>, vector<32x256xbf16>
    %c0_9 = arith.constant 0 : index
    %c0_10 = arith.constant 0 : index
    %10 = vector.load %arg6[%c0_9, %c0_10] : memref<256x512xbf16, #tpu.memory_space<vmem>>, vector<256x512xbf16>
    %cst_11 = arith.constant dense<0.000000e+00> : vector<32x512xf32>
    %11 = tpu.matmul %9, %10, %cst_11 {dimension_numbers = #tpu.dot_dimension_numbers<[1], [0], [0], [1], [0, 0, 1, 1], [], []>} : vector<32x256xbf16>, vector<256x512xbf16>, vector<32x512xf32> -> vector<32x512xf32>
    %c0_12 = arith.constant 0 : index
    %c0_13 = arith.constant 0 : index
    %12 = vector.load %arg7[%c0_12, %c0_13] : memref<1x512xf32, #tpu.memory_space<vmem>>, vector<1x512xf32>
    %13 = vector.broadcast %12 : vector<1x512xf32> to vector<32x512xf32>
    %14 = arith.addf %11, %13 : vector<32x512xf32>
    %15 = vector.extract_strided_slice %14 {offsets = [0, 0], sizes = [16, 512], strides = [1, 1]} : vector<32x512xf32> to vector<16x512xf32>
    %16 = vector.extract_strided_slice %15 {offsets = [0, 0], sizes = [16, 256], strides = [1, 1]} : vector<16x512xf32> to vector<16x256xf32>
    %17 = tpu.transpose %16, [1, 0] : vector<16x256xf32> -> vector<256x16xf32>
    %18 = vector.extract_strided_slice %15 {offsets = [0, 256], sizes = [16, 256], strides = [1, 1]} : vector<16x512xf32> to vector<16x256xf32>
    %19 = vector.extract_strided_slice %8 {offsets = [0, 0], sizes = [8, 256], strides = [1, 1]} : vector<16x256xf32> to vector<8x256xf32>
    %20 = vector.extract_strided_slice %19 {offsets = [0, 0], sizes = [8, 64], strides = [1, 1]} : vector<8x256xf32> to vector<8x64xf32>
    %21 = vector.extract_strided_slice %17 {offsets = [0, 0], sizes = [64, 16], strides = [1, 1]} : vector<256x16xf32> to vector<64x16xf32>
    %cst_14 = arith.constant dense<0.000000e+00> : vector<8x16xf32>
    %22 = tpu.matmul %20, %21, %cst_14 {dimension_numbers = #tpu.dot_dimension_numbers<[1], [0], [0], [1], [0, 0, 1, 1], [], []>} : vector<8x64xf32>, vector<64x16xf32>, vector<8x16xf32> -> vector<8x16xf32>
    %cst_15 = arith.constant dense<0xFF800000> : vector<8xf32>
    %23 = vector.multi_reduction <maximumf>, %22, %cst_15 [1] : vector<8x16xf32> to vector<8xf32>
    %24 = vector.shape_cast %23 : vector<8xf32> to vector<8x1xf32>
    %25 = vector.broadcast %24 : vector<8x1xf32> to vector<8x16xf32>
    %26 = arith.subf %22, %25 : vector<8x16xf32>
    %27 = math.exp %26 : vector<8x16xf32>
    %cst_16 = arith.constant dense<0.000000e+00> : vector<8xf32>
    %28 = vector.multi_reduction <add>, %27, %cst_16 [1] : vector<8x16xf32> to vector<8xf32>
    %29 = vector.shape_cast %28 : vector<8xf32> to vector<8x1xf32>
    %30 = tpu.reciprocal %29 {approx = true} : vector<8x1xf32> -> vector<8x1xf32>
    %31 = vector.broadcast %30 : vector<8x1xf32> to vector<8x16xf32>
    %32 = arith.mulf %27, %31 : vector<8x16xf32>
    %33 = vector.extract_strided_slice %18 {offsets = [0, 0], sizes = [16, 64], strides = [1, 1]} : vector<16x256xf32> to vector<16x64xf32>
    %cst_17 = arith.constant dense<0.000000e+00> : vector<8x64xf32>
    %34 = tpu.matmul %32, %33, %cst_17 {dimension_numbers = #tpu.dot_dimension_numbers<[1], [0], [0], [1], [0, 0, 1, 1], [], []>} : vector<8x16xf32>, vector<16x64xf32>, vector<8x64xf32> -> vector<8x64xf32>
    %35 = vector.extract_strided_slice %19 {offsets = [0, 64], sizes = [8, 64], strides = [1, 1]} : vector<8x256xf32> to vector<8x64xf32>
    %36 = vector.extract_strided_slice %17 {offsets = [64, 0], sizes = [64, 16], strides = [1, 1]} : vector<256x16xf32> to vector<64x16xf32>
    %cst_18 = arith.constant dense<0.000000e+00> : vector<8x16xf32>
    %37 = tpu.matmul %35, %36, %cst_18 {dimension_numbers = #tpu.dot_dimension_numbers<[1], [0], [0], [1], [0, 0, 1, 1], [], []>} : vector<8x64xf32>, vector<64x16xf32>, vector<8x16xf32> -> vector<8x16xf32>
    %cst_19 = arith.constant dense<0xFF800000> : vector<8xf32>
    %38 = vector.multi_reduction <maximumf>, %37, %cst_19 [1] : vector<8x16xf32> to vector<8xf32>
    %39 = vector.shape_cast %38 : vector<8xf32> to vector<8x1xf32>
    %40 = vector.broadcast %39 : vector<8x1xf32> to vector<8x16xf32>
    %41 = arith.subf %37, %40 : vector<8x16xf32>
    %42 = math.exp %41 : vector<8x16xf32>
    %cst_20 = arith.constant dense<0.000000e+00> : vector<8xf32>
    %43 = vector.multi_reduction <add>, %42, %cst_20 [1] : vector<8x16xf32> to vector<8xf32>
    %44 = vector.shape_cast %43 : vector<8xf32> to vector<8x1xf32>
    %45 = tpu.reciprocal %44 {approx = true} : vector<8x1xf32> -> vector<8x1xf32>
    %46 = vector.broadcast %45 : vector<8x1xf32> to vector<8x16xf32>
    %47 = arith.mulf %42, %46 : vector<8x16xf32>
    %48 = vector.extract_strided_slice %18 {offsets = [0, 64], sizes = [16, 64], strides = [1, 1]} : vector<16x256xf32> to vector<16x64xf32>
    %cst_21 = arith.constant dense<0.000000e+00> : vector<8x64xf32>
    %49 = tpu.matmul %47, %48, %cst_21 {dimension_numbers = #tpu.dot_dimension_numbers<[1], [0], [0], [1], [0, 0, 1, 1], [], []>} : vector<8x16xf32>, vector<16x64xf32>, vector<8x64xf32> -> vector<8x64xf32>
    %50 = vector.extract_strided_slice %19 {offsets = [0, 128], sizes = [8, 64], strides = [1, 1]} : vector<8x256xf32> to vector<8x64xf32>
    %51 = vector.extract_strided_slice %17 {offsets = [128, 0], sizes = [64, 16], strides = [1, 1]} : vector<256x16xf32> to vector<64x16xf32>
    %cst_22 = arith.constant dense<0.000000e+00> : vector<8x16xf32>
    %52 = tpu.matmul %50, %51, %cst_22 {dimension_numbers = #tpu.dot_dimension_numbers<[1], [0], [0], [1], [0, 0, 1, 1], [], []>} : vector<8x64xf32>, vector<64x16xf32>, vector<8x16xf32> -> vector<8x16xf32>
    %cst_23 = arith.constant dense<0xFF800000> : vector<8xf32>
    %53 = vector.multi_reduction <maximumf>, %52, %cst_23 [1] : vector<8x16xf32> to vector<8xf32>
    %54 = vector.shape_cast %53 : vector<8xf32> to vector<8x1xf32>
    %55 = vector.broadcast %54 : vector<8x1xf32> to vector<8x16xf32>
    %56 = arith.subf %52, %55 : vector<8x16xf32>
    %57 = math.exp %56 : vector<8x16xf32>
    %cst_24 = arith.constant dense<0.000000e+00> : vector<8xf32>
    %58 = vector.multi_reduction <add>, %57, %cst_24 [1] : vector<8x16xf32> to vector<8xf32>
    %59 = vector.shape_cast %58 : vector<8xf32> to vector<8x1xf32>
    %60 = tpu.reciprocal %59 {approx = true} : vector<8x1xf32> -> vector<8x1xf32>
    %61 = vector.broadcast %60 : vector<8x1xf32> to vector<8x16xf32>
    %62 = arith.mulf %57, %61 : vector<8x16xf32>
    %63 = vector.extract_strided_slice %18 {offsets = [0, 128], sizes = [16, 64], strides = [1, 1]} : vector<16x256xf32> to vector<16x64xf32>
    %cst_25 = arith.constant dense<0.000000e+00> : vector<8x64xf32>
    %64 = tpu.matmul %62, %63, %cst_25 {dimension_numbers = #tpu.dot_dimension_numbers<[1], [0], [0], [1], [0, 0, 1, 1], [], []>} : vector<8x16xf32>, vector<16x64xf32>, vector<8x64xf32> -> vector<8x64xf32>
    %65 = vector.extract_strided_slice %19 {offsets = [0, 192], sizes = [8, 64], strides = [1, 1]} : vector<8x256xf32> to vector<8x64xf32>
    %66 = vector.extract_strided_slice %17 {offsets = [192, 0], sizes = [64, 16], strides = [1, 1]} : vector<256x16xf32> to vector<64x16xf32>
    %cst_26 = arith.constant dense<0.000000e+00> : vector<8x16xf32>
    %67 = tpu.matmul %65, %66, %cst_26 {dimension_numbers = #tpu.dot_dimension_numbers<[1], [0], [0], [1], [0, 0, 1, 1], [], []>} : vector<8x64xf32>, vector<64x16xf32>, vector<8x16xf32> -> vector<8x16xf32>
    %cst_27 = arith.constant dense<0xFF800000> : vector<8xf32>
    %68 = vector.multi_reduction <maximumf>, %67, %cst_27 [1] : vector<8x16xf32> to vector<8xf32>
    %69 = vector.shape_cast %68 : vector<8xf32> to vector<8x1xf32>
    %70 = vector.broadcast %69 : vector<8x1xf32> to vector<8x16xf32>
    %71 = arith.subf %67, %70 : vector<8x16xf32>
    %72 = math.exp %71 : vector<8x16xf32>
    %cst_28 = arith.constant dense<0.000000e+00> : vector<8xf32>
    %73 = vector.multi_reduction <add>, %72, %cst_28 [1] : vector<8x16xf32> to vector<8xf32>
    %74 = vector.shape_cast %73 : vector<8xf32> to vector<8x1xf32>
    %75 = tpu.reciprocal %74 {approx = true} : vector<8x1xf32> -> vector<8x1xf32>
    %76 = vector.broadcast %75 : vector<8x1xf32> to vector<8x16xf32>
    %77 = arith.mulf %72, %76 : vector<8x16xf32>
    %78 = vector.extract_strided_slice %18 {offsets = [0, 192], sizes = [16, 64], strides = [1, 1]} : vector<16x256xf32> to vector<16x64xf32>
    %cst_29 = arith.constant dense<0.000000e+00> : vector<8x64xf32>
    %79 = tpu.matmul %77, %78, %cst_29 {dimension_numbers = #tpu.dot_dimension_numbers<[1], [0], [0], [1], [0, 0, 1, 1], [], []>} : vector<8x16xf32>, vector<16x64xf32>, vector<8x64xf32> -> vector<8x64xf32>
    %80 = tpu.concatenate %34, %49, %64, %79 in 1 : vector<8x64xf32>, vector<8x64xf32>, vector<8x64xf32>, vector<8x64xf32> -> vector<8x256xf32>
    %81 = vector.extract_strided_slice %14 {offsets = [16, 0], sizes = [16, 512], strides = [1, 1]} : vector<32x512xf32> to vector<16x512xf32>
    %82 = vector.extract_strided_slice %81 {offsets = [0, 0], sizes = [16, 256], strides = [1, 1]} : vector<16x512xf32> to vector<16x256xf32>
    %83 = tpu.transpose %82, [1, 0] : vector<16x256xf32> -> vector<256x16xf32>
    %84 = vector.extract_strided_slice %81 {offsets = [0, 256], sizes = [16, 256], strides = [1, 1]} : vector<16x512xf32> to vector<16x256xf32>
    %85 = vector.extract_strided_slice %8 {offsets = [8, 0], sizes = [8, 256], strides = [1, 1]} : vector<16x256xf32> to vector<8x256xf32>
    %86 = vector.extract_strided_slice %85 {offsets = [0, 0], sizes = [8, 64], strides = [1, 1]} : vector<8x256xf32> to vector<8x64xf32>
    %87 = vector.extract_strided_slice %83 {offsets = [0, 0], sizes = [64, 16], strides = [1, 1]} : vector<256x16xf32> to vector<64x16xf32>
    %cst_30 = arith.constant dense<0.000000e+00> : vector<8x16xf32>
    %88 = tpu.matmul %86, %87, %cst_30 {dimension_numbers = #tpu.dot_dimension_numbers<[1], [0], [0], [1], [0, 0, 1, 1], [], []>} : vector<8x64xf32>, vector<64x16xf32>, vector<8x16xf32> -> vector<8x16xf32>
    %cst_31 = arith.constant dense<0xFF800000> : vector<8xf32>
    %89 = vector.multi_reduction <maximumf>, %88, %cst_31 [1] : vector<8x16xf32> to vector<8xf32>
    %90 = vector.shape_cast %89 : vector<8xf32> to vector<8x1xf32>
    %91 = vector.broadcast %90 : vector<8x1xf32> to vector<8x16xf32>
    %92 = arith.subf %88, %91 : vector<8x16xf32>
    %93 = math.exp %92 : vector<8x16xf32>
    %cst_32 = arith.constant dense<0.000000e+00> : vector<8xf32>
    %94 = vector.multi_reduction <add>, %93, %cst_32 [1] : vector<8x16xf32> to vector<8xf32>
    %95 = vector.shape_cast %94 : vector<8xf32> to vector<8x1xf32>
    %96 = tpu.reciprocal %95 {approx = true} : vector<8x1xf32> -> vector<8x1xf32>
    %97 = vector.broadcast %96 : vector<8x1xf32> to vector<8x16xf32>
    %98 = arith.mulf %93, %97 : vector<8x16xf32>
    %99 = vector.extract_strided_slice %84 {offsets = [0, 0], sizes = [16, 64], strides = [1, 1]} : vector<16x256xf32> to vector<16x64xf32>
    %cst_33 = arith.constant dense<0.000000e+00> : vector<8x64xf32>
    %100 = tpu.matmul %98, %99, %cst_33 {dimension_numbers = #tpu.dot_dimension_numbers<[1], [0], [0], [1], [0, 0, 1, 1], [], []>} : vector<8x16xf32>, vector<16x64xf32>, vector<8x64xf32> -> vector<8x64xf32>
    %101 = vector.extract_strided_slice %85 {offsets = [0, 64], sizes = [8, 64], strides = [1, 1]} : vector<8x256xf32> to vector<8x64xf32>
    %102 = vector.extract_strided_slice %83 {offsets = [64, 0], sizes = [64, 16], strides = [1, 1]} : vector<256x16xf32> to vector<64x16xf32>
    %cst_34 = arith.constant dense<0.000000e+00> : vector<8x16xf32>
    %103 = tpu.matmul %101, %102, %cst_34 {dimension_numbers = #tpu.dot_dimension_numbers<[1], [0], [0], [1], [0, 0, 1, 1], [], []>} : vector<8x64xf32>, vector<64x16xf32>, vector<8x16xf32> -> vector<8x16xf32>
    %cst_35 = arith.constant dense<0xFF800000> : vector<8xf32>
    %104 = vector.multi_reduction <maximumf>, %103, %cst_35 [1] : vector<8x16xf32> to vector<8xf32>
    %105 = vector.shape_cast %104 : vector<8xf32> to vector<8x1xf32>
    %106 = vector.broadcast %105 : vector<8x1xf32> to vector<8x16xf32>
    %107 = arith.subf %103, %106 : vector<8x16xf32>
    %108 = math.exp %107 : vector<8x16xf32>
    %cst_36 = arith.constant dense<0.000000e+00> : vector<8xf32>
    %109 = vector.multi_reduction <add>, %108, %cst_36 [1] : vector<8x16xf32> to vector<8xf32>
    %110 = vector.shape_cast %109 : vector<8xf32> to vector<8x1xf32>
    %111 = tpu.reciprocal %110 {approx = true} : vector<8x1xf32> -> vector<8x1xf32>
    %112 = vector.broadcast %111 : vector<8x1xf32> to vector<8x16xf32>
    %113 = arith.mulf %108, %112 : vector<8x16xf32>
    %114 = vector.extract_strided_slice %84 {offsets = [0, 64], sizes = [16, 64], strides = [1, 1]} : vector<16x256xf32> to vector<16x64xf32>
    %cst_37 = arith.constant dense<0.000000e+00> : vector<8x64xf32>
    %115 = tpu.matmul %113, %114, %cst_37 {dimension_numbers = #tpu.dot_dimension_numbers<[1], [0], [0], [1], [0, 0, 1, 1], [], []>} : vector<8x16xf32>, vector<16x64xf32>, vector<8x64xf32> -> vector<8x64xf32>
    %116 = vector.extract_strided_slice %85 {offsets = [0, 128], sizes = [8, 64], strides = [1, 1]} : vector<8x256xf32> to vector<8x64xf32>
    %117 = vector.extract_strided_slice %83 {offsets = [128, 0], sizes = [64, 16], strides = [1, 1]} : vector<256x16xf32> to vector<64x16xf32>
    %cst_38 = arith.constant dense<0.000000e+00> : vector<8x16xf32>
    %118 = tpu.matmul %116, %117, %cst_38 {dimension_numbers = #tpu.dot_dimension_numbers<[1], [0], [0], [1], [0, 0, 1, 1], [], []>} : vector<8x64xf32>, vector<64x16xf32>, vector<8x16xf32> -> vector<8x16xf32>
    %cst_39 = arith.constant dense<0xFF800000> : vector<8xf32>
    %119 = vector.multi_reduction <maximumf>, %118, %cst_39 [1] : vector<8x16xf32> to vector<8xf32>
    %120 = vector.shape_cast %119 : vector<8xf32> to vector<8x1xf32>
    %121 = vector.broadcast %120 : vector<8x1xf32> to vector<8x16xf32>
    %122 = arith.subf %118, %121 : vector<8x16xf32>
    %123 = math.exp %122 : vector<8x16xf32>
    %cst_40 = arith.constant dense<0.000000e+00> : vector<8xf32>
    %124 = vector.multi_reduction <add>, %123, %cst_40 [1] : vector<8x16xf32> to vector<8xf32>
    %125 = vector.shape_cast %124 : vector<8xf32> to vector<8x1xf32>
    %126 = tpu.reciprocal %125 {approx = true} : vector<8x1xf32> -> vector<8x1xf32>
    %127 = vector.broadcast %126 : vector<8x1xf32> to vector<8x16xf32>
    %128 = arith.mulf %123, %127 : vector<8x16xf32>
    %129 = vector.extract_strided_slice %84 {offsets = [0, 128], sizes = [16, 64], strides = [1, 1]} : vector<16x256xf32> to vector<16x64xf32>
    %cst_41 = arith.constant dense<0.000000e+00> : vector<8x64xf32>
    %130 = tpu.matmul %128, %129, %cst_41 {dimension_numbers = #tpu.dot_dimension_numbers<[1], [0], [0], [1], [0, 0, 1, 1], [], []>} : vector<8x16xf32>, vector<16x64xf32>, vector<8x64xf32> -> vector<8x64xf32>
    %131 = vector.extract_strided_slice %85 {offsets = [0, 192], sizes = [8, 64], strides = [1, 1]} : vector<8x256xf32> to vector<8x64xf32>
    %132 = vector.extract_strided_slice %83 {offsets = [192, 0], sizes = [64, 16], strides = [1, 1]} : vector<256x16xf32> to vector<64x16xf32>
    %cst_42 = arith.constant dense<0.000000e+00> : vector<8x16xf32>
    %133 = tpu.matmul %131, %132, %cst_42 {dimension_numbers = #tpu.dot_dimension_numbers<[1], [0], [0], [1], [0, 0, 1, 1], [], []>} : vector<8x64xf32>, vector<64x16xf32>, vector<8x16xf32> -> vector<8x16xf32>
    %cst_43 = arith.constant dense<0xFF800000> : vector<8xf32>
    %134 = vector.multi_reduction <maximumf>, %133, %cst_43 [1] : vector<8x16xf32> to vector<8xf32>
    %135 = vector.shape_cast %134 : vector<8xf32> to vector<8x1xf32>
    %136 = vector.broadcast %135 : vector<8x1xf32> to vector<8x16xf32>
    %137 = arith.subf %133, %136 : vector<8x16xf32>
    %138 = math.exp %137 : vector<8x16xf32>
    %cst_44 = arith.constant dense<0.000000e+00> : vector<8xf32>
    %139 = vector.multi_reduction <add>, %138, %cst_44 [1] : vector<8x16xf32> to vector<8xf32>
    %140 = vector.shape_cast %139 : vector<8xf32> to vector<8x1xf32>
    %141 = tpu.reciprocal %140 {approx = true} : vector<8x1xf32> -> vector<8x1xf32>
    %142 = vector.broadcast %141 : vector<8x1xf32> to vector<8x16xf32>
    %143 = arith.mulf %138, %142 : vector<8x16xf32>
    %144 = vector.extract_strided_slice %84 {offsets = [0, 192], sizes = [16, 64], strides = [1, 1]} : vector<16x256xf32> to vector<16x64xf32>
    %cst_45 = arith.constant dense<0.000000e+00> : vector<8x64xf32>
    %145 = tpu.matmul %143, %144, %cst_45 {dimension_numbers = #tpu.dot_dimension_numbers<[1], [0], [0], [1], [0, 0, 1, 1], [], []>} : vector<8x16xf32>, vector<16x64xf32>, vector<8x64xf32> -> vector<8x64xf32>
    %146 = tpu.concatenate %100, %115, %130, %145 in 1 : vector<8x64xf32>, vector<8x64xf32>, vector<8x64xf32>, vector<8x64xf32> -> vector<8x256xf32>
    %147 = tpu.concatenate %80, %146 in 0 : vector<8x256xf32>, vector<8x256xf32> -> vector<16x256xf32>
    %148 = arith.truncf %147 : vector<16x256xf32> to vector<16x256xbf16>
    %c0_46 = arith.constant 0 : index
    %c0_47 = arith.constant 0 : index
    %149 = vector.load %arg8[%c0_46, %c0_47] : memref<256x256xbf16, #tpu.memory_space<vmem>>, vector<256x256xbf16>
    %cst_48 = arith.constant dense<0.000000e+00> : vector<16x256xf32>
    %150 = tpu.matmul %148, %149, %cst_48 {dimension_numbers = #tpu.dot_dimension_numbers<[1], [0], [0], [1], [0, 0, 1, 1], [], []>} : vector<16x256xbf16>, vector<256x256xbf16>, vector<16x256xf32> -> vector<16x256xf32>
    %c0_49 = arith.constant 0 : index
    %c0_50 = arith.constant 0 : index
    %151 = vector.load %arg9[%c0_49, %c0_50] : memref<1x256xf32, #tpu.memory_space<vmem>>, vector<1x256xf32>
    %152 = vector.broadcast %151 : vector<1x256xf32> to vector<16x256xf32>
    %153 = arith.addf %150, %152 : vector<16x256xf32>
    %154 = arith.addf %2, %153 : vector<16x256xf32>
    %cst_51 = arith.constant dense<0.000000e+00> : vector<16xf32>
    %155 = vector.multi_reduction <add>, %154, %cst_51 [1] : vector<16x256xf32> to vector<16xf32>
    %156 = vector.shape_cast %155 : vector<16xf32> to vector<16x1xf32>
    %cst_52 = arith.constant 2.560000e+02 : f32
    %157 = vector.broadcast %cst_52 : f32 to vector<16x1xf32>
    %158 = arith.divf %156, %157 : vector<16x1xf32>
    %159 = vector.broadcast %158 : vector<16x1xf32> to vector<16x256xf32>
    %160 = arith.subf %154, %159 : vector<16x256xf32>
    %161 = arith.mulf %160, %160 : vector<16x256xf32>
    %cst_53 = arith.constant dense<0.000000e+00> : vector<16xf32>
    %162 = vector.multi_reduction <add>, %161, %cst_53 [1] : vector<16x256xf32> to vector<16xf32>
    %163 = vector.shape_cast %162 : vector<16xf32> to vector<16x1xf32>
    %cst_54 = arith.constant 2.560000e+02 : f32
    %164 = vector.broadcast %cst_54 : f32 to vector<16x1xf32>
    %165 = arith.divf %163, %164 : vector<16x1xf32>
    %cst_55 = arith.constant 9.99999974E-6 : f32
    %166 = vector.broadcast %cst_55 : f32 to vector<16x1xf32>
    %167 = arith.addf %165, %166 : vector<16x1xf32>
    %168 = math.rsqrt %167 : vector<16x1xf32>
    %169 = vector.broadcast %158 : vector<16x1xf32> to vector<16x256xf32>
    %170 = arith.subf %154, %169 : vector<16x256xf32>
    %171 = vector.broadcast %168 : vector<16x1xf32> to vector<16x256xf32>
    %172 = arith.mulf %170, %171 : vector<16x256xf32>
    %c0_56 = arith.constant 0 : index
    %c0_57 = arith.constant 0 : index
    %173 = vector.load %arg10[%c0_56, %c0_57] : memref<1x256xf32, #tpu.memory_space<vmem>>, vector<1x256xf32>
    %174 = vector.broadcast %173 : vector<1x256xf32> to vector<16x256xf32>
    %175 = arith.mulf %172, %174 : vector<16x256xf32>
    %c0_58 = arith.constant 0 : index
    %c0_59 = arith.constant 0 : index
    %176 = vector.load %arg11[%c0_58, %c0_59] : memref<1x256xf32, #tpu.memory_space<vmem>>, vector<1x256xf32>
    %177 = vector.broadcast %176 : vector<1x256xf32> to vector<16x256xf32>
    %178 = arith.addf %175, %177 : vector<16x256xf32>
    %c0_60 = arith.constant 0 : index
    %c0_61 = arith.constant 0 : index
    %179 = vector.load %arg12[%c0_60, %c0_61] : memref<16x256xf32, #tpu.memory_space<vmem>>, vector<16x256xf32>
    tpu.vector_store %arg12[%c0_60, %c0_61], %178 {strides = array<i32>} : memref<16x256xf32, #tpu.memory_space<vmem>>, vector<16x256xf32>,
    return
  }
  func.func @transform_0(%arg0: i32) -> (i32, i32) {
    %c0_i32 = arith.constant 0 : i32
    %c0_i32_0 = arith.constant 0 : i32
    %c0_i32_1 = arith.constant 0 : i32
    return %c0_i32, %c0_i32_0 : i32, i32
  }
  func.func @transform_1(%arg0: i32) -> (i32, i32) {
    %c0_i32 = arith.constant 0 : i32
    %c0_i32_0 = arith.constant 0 : i32
    %c0_i32_1 = arith.constant 0 : i32
    return %c0_i32, %c0_i32_0 : i32, i32
  }
  func.func @transform_2(%arg0: i32) -> (i32, i32) {
    %c0_i32 = arith.constant 0 : i32
    %c0_i32_0 = arith.constant 0 : i32
    %c0_i32_1 = arith.constant 0 : i32
    return %c0_i32, %c0_i32_0 : i32, i32
  }
  func.func @transform_3(%arg0: i32) -> (i32, i32) {
    %c0_i32 = arith.constant 0 : i32
    %c0_i32_0 = arith.constant 0 : i32
    %c0_i32_1 = arith.constant 0 : i32
    return %c0_i32, %c0_i32_0 : i32, i32
  }
  func.func @transform_4(%arg0: i32) -> (i32, i32) {
    %c0_i32 = arith.constant 0 : i32
    %c0_i32_0 = arith.constant 0 : i32
    %c0_i32_1 = arith.constant 0 : i32
    return %c0_i32, %c0_i32_0 : i32, i32
  }
  func.func @transform_5(%arg0: i32) -> (i32, i32) {
    %c0_i32 = arith.constant 0 : i32
    %c0_i32_0 = arith.constant 0 : i32
    %c0_i32_1 = arith.constant 0 : i32
    return %c0_i32, %c0_i32_0 : i32, i32
  }
  func.func @transform_6(%arg0: i32) -> (i32, i32) {
    %c0_i32 = arith.constant 0 : i32
    %c0_i32_0 = arith.constant 0 : i32
    %c0_i32_1 = arith.constant 0 : i32
    return %c0_i32, %c0_i32_0 : i32, i32
  }
  func.func @transform_7(%arg0: i32) -> (i32, i32) {
    %c0_i32 = arith.constant 0 : i32
    %c0_i32_0 = arith.constant 0 : i32
    %c0_i32_1 = arith.constant 0 : i32
    return %c0_i32, %c0_i32_0 : i32, i32
  }
  func.func @transform_8(%arg0: i32) -> (i32, i32) {
    %c0_i32 = arith.constant 0 : i32
    %c0_i32_0 = arith.constant 0 : i32
    %c0_i32_1 = arith.constant 0 : i32
    return %c0_i32, %c0_i32_0 : i32, i32
  }
  func.func @transform_9(%arg0: i32) -> (i32, i32) {
    %c0_i32 = arith.constant 0 : i32
    %c0_i32_0 = arith.constant 0 : i32
    %c0_i32_1 = arith.constant 0 : i32
    return %c0_i32, %c0_i32_0 : i32, i32
  }
  func.func @transform_10(%arg0: i32) -> (i32, i32) {
    %c0_i32 = arith.constant 0 : i32
    %c0_i32_0 = arith.constant 0 : i32
    %c0_i32_1 = arith.constant 0 : i32
    return %c0_i32, %c0_i32_0 : i32, i32
  }
  func.func @transform_11(%arg0: i32) -> (i32, i32) {
    %c0_i32 = arith.constant 0 : i32
    %c0_i32_0 = arith.constant 0 : i32
    %c0_i32_1 = arith.constant 0 : i32
    return %c0_i32, %c0_i32_0 : i32, i32
  }
}

</mosaic_0001>

<llo_original>
// kernel: audio_video_inter_forward.1
$region0: #{audio_video_inter_forward.1}
  #allocation0 [shape = 'u32[]', space=smem, size = 0x4, offset = 0x4, fixed_abs, tag = 'smem constant byte address 0x4 - core index']
  #allocation1 [shape = 'u32[72,128]{1,0:T(1,128)}', space=vmem, size = 0x9000, scoped, tag = 'internal scratch']
  %s0 = inlined_call_operand.vmem [shape: f32[16,256], index: 0, kind: input, shape index: {}]
  %s1 = inlined_call_operand.vmem [shape: f32[16,256], index: 1, kind: input, shape index: {}]
  %s2 = inlined_call_operand.vmem [shape: bf16[32,256], index: 2, kind: input, shape index: {}]
  %s3 = inlined_call_operand.hbm [shape: bf16[256,256], index: 3, kind: input, shape index: {}]
  %s4 = inlined_call_operand.vmem [shape: f32[1,256], index: 4, kind: input, shape index: {}]
  %s5 = inlined_call_operand.hbm [shape: bf16[256,512], index: 5, kind: input, shape index: {}]
  %s6 = inlined_call_operand.vmem [shape: f32[1,512], index: 6, kind: input, shape index: {}]
  %s7 = inlined_call_operand.hbm [shape: bf16[256,256], index: 7, kind: input, shape index: {}]
  %s8 = inlined_call_operand.vmem [shape: f32[1,256], index: 8, kind: input, shape index: {}]
  %s9 = inlined_call_operand.vmem [shape: f32[1,256], index: 9, kind: input, shape index: {}]
  %s10 = inlined_call_operand.vmem [shape: f32[1,256], index: 10, kind: input, shape index: {}]
  %s11 = inlined_call_operand.vmem [shape: f32[16,256], index: 11, kind: output, shape index: {}]
  %s12 = sld [smem:[#allocation0]]
  $region66: #{audio_video_inter_forward.1} parent=0
    _
  %s14 = ssub.s32 1, %s12
  %s15 = scalar_select 0, %s14, %s12
  $region1: #{audio_video_inter_forward.1} parent=0
    #allocation2 [shape = 'u8[131072]{0}', space=vmem, size = 0x20000, scoped, tag = 'input window, operand 3, single buffered']
    #allocation3 [shape = 's32[1]{0}', space=sflag, size = 0x4, scoped, tag = 'scoped memory for audio_video_inter_forward.1']
    #allocation4 [shape = 'u8[262144]{0}', space=vmem, size = 0x40000, scoped, tag = 'input window, operand 5, single buffered']
    #allocation5 [shape = 's32[1]{0}', space=sflag, size = 0x4, scoped, tag = 'scoped memory for audio_video_inter_forward.1']
    #allocation6 [shape = 'u8[131072]{0}', space=vmem, size = 0x20000, scoped, tag = 'input window, operand 7, single buffered']
    %16 = vsyncpa [#allocation3], 0
    %17 = vsyncpa [#allocation5], 0
    // Predicated region
    $region2: #{audio_video_inter_forward.1} parent=1 // pred_check
      _
    $region3: #{audio_video_inter_forward.1} parent=1 // pred_check_branch
      %19 = sbr.rel (0) target = $region5
    $region4: #{audio_video_inter_forward.1} parent=1 // pred_region
      _
    $region5: #{audio_video_inter_forward.1} parent=1 // pred_fallthru
      _
    // Predicated region
    $region6: #{audio_video_inter_forward.1} parent=1 // pred_check
      _
    $region7: #{audio_video_inter_forward.1} parent=1 // pred_check_branch
      %21 = sbr.rel (0) target = $region9
    $region8: #{audio_video_inter_forward.1} parent=1 // pred_region
      _
    $region9: #{audio_video_inter_forward.1} parent=1 // pred_fallthru
      _
    // Predicated region
    $region10: #{audio_video_inter_forward.1} parent=1 // pred_check
      _
    $region11: #{audio_video_inter_forward.1} parent=1 // pred_check_branch
      %23 = sbr.rel (0) target = $region13
    $region12: #{audio_video_inter_forward.1} parent=1 // pred_region
      _
    $region13: #{audio_video_inter_forward.1} parent=1 // pred_fallthru
      _
    // Predicated region
    $region14: #{audio_video_inter_forward.1} parent=1 // pred_check
      _
    $region15: #{audio_video_inter_forward.1} parent=1 // pred_check_branch
      %25 = sbr.rel (0) target = $region17
    $region16: #{audio_video_inter_forward.1} parent=1 // pred_region
      %27 = vsyncadd [#allocation3], 0
      %s28 = sshll.u32 %s3, 4
      %s29 = int_to_ptr.hbm [resolvable:$true] %s28
      %s30 = sshll.u32 [#allocation2], 4
      %s31 = int_to_ptr.vmem [resolvable:$true] %s30
      %36 = dma.hbm_to_vmem [thread:$0]  %s29, 4096, %s31, [#allocation3], 128, 128, 8
    $region17: #{audio_video_inter_forward.1} parent=1 // pred_fallthru
      _
    // Predicated region
    $region18: #{audio_video_inter_forward.1} parent=1 // pred_check
      _
    $region19: #{audio_video_inter_forward.1} parent=1 // pred_check_branch
      %38 = sbr.rel (0) target = $region21
    $region20: #{audio_video_inter_forward.1} parent=1 // pred_region
      _
    $region21: #{audio_video_inter_forward.1} parent=1 // pred_fallthru
      _
    // Predicated region
    $region22: #{audio_video_inter_forward.1} parent=1 // pred_check
      _
    $region23: #{audio_video_inter_forward.1} parent=1 // pred_check_branch
      %40 = sbr.rel (0) target = $region25
    $region24: #{audio_video_inter_forward.1} parent=1 // pred_region
      %42 = vsyncadd [#allocation5], 0
      %s43 = sshll.u32 %s5, 4
      %s44 = int_to_ptr.hbm [resolvable:$true] %s43
      %s45 = sshll.u32 [#allocation4], 4
      %s46 = int_to_ptr.vmem [resolvable:$true] %s45
      %51 = dma.hbm_to_vmem [thread:$0]  %s44, 8192, %s46, [#allocation5], 256, 256, 16
    $region25: #{audio_video_inter_forward.1} parent=1 // pred_fallthru
      _
    // Predicated region
    $region26: #{audio_video_inter_forward.1} parent=1 // pred_check
      _
    $region27: #{audio_video_inter_forward.1} parent=1 // pred_check_branch
      %53 = sbr.rel (0) target = $region29
    $region28: #{audio_video_inter_forward.1} parent=1 // pred_region
      _
    $region29: #{audio_video_inter_forward.1} parent=1 // pred_fallthru
      _
    // Predicated region
    $region30: #{audio_video_inter_forward.1} parent=1 // pred_check
      _
    $region31: #{audio_video_inter_forward.1} parent=1 // pred_check_branch
      %55 = sbr.rel (0) target = $region33
    $region32: #{audio_video_inter_forward.1} parent=1 // pred_region
      %57 = vsyncadd [#allocation5], 0
      %s58 = sshll.u32 %s7, 4
      %s59 = int_to_ptr.hbm [resolvable:$true] %s58
      %s60 = sshll.u32 [#allocation6], 4
      %s61 = int_to_ptr.vmem [resolvable:$true] %s60
      %66 = dma.hbm_to_vmem [thread:$0]  %s59, 4096, %s61, [#allocation5], 128, 128, 8
    $region33: #{audio_video_inter_forward.1} parent=1 // pred_fallthru
      _
    // Predicated region
    $region34: #{audio_video_inter_forward.1} parent=1 // pred_check
      _
    $region35: #{audio_video_inter_forward.1} parent=1 // pred_check_branch
      %68 = sbr.rel (0) target = $region37
    $region36: #{audio_video_inter_forward.1} parent=1 // pred_region
      _
    $region37: #{audio_video_inter_forward.1} parent=1 // pred_fallthru
      _
    // Predicated region
    $region38: #{audio_video_inter_forward.1} parent=1 // pred_check
      _
    $region39: #{audio_video_inter_forward.1} parent=1 // pred_check_branch
      %70 = sbr.rel (0) target = $region41
    $region40: #{audio_video_inter_forward.1} parent=1 // pred_region
      _
    $region41: #{audio_video_inter_forward.1} parent=1 // pred_fallthru
      _
    // Predicated region
    $region42: #{audio_video_inter_forward.1} parent=1 // pred_check
      _
    $region43: #{audio_video_inter_forward.1} parent=1 // pred_check_branch
      %72 = sbr.rel (0) target = $region45
    $region44: #{audio_video_inter_forward.1} parent=1 // pred_region
      _
    $region45: #{audio_video_inter_forward.1} parent=1 // pred_fallthru
      _
    // Predicated region
    $region46: #{audio_video_inter_forward.1} parent=1 // pred_check
      _
    $region47: #{audio_video_inter_forward.1} parent=1 // pred_check_branch
      %74 = sbr.rel (0) target = $region49
    $region48: #{audio_video_inter_forward.1} parent=1 // pred_region
      %76 = dma.done [#allocation3], 4096
    $region49: #{audio_video_inter_forward.1} parent=1 // pred_fallthru
      _
    // Predicated region
    $region50: #{audio_video_inter_forward.1} parent=1 // pred_check
      _
    $region51: #{audio_video_inter_forward.1} parent=1 // pred_check_branch
      %78 = sbr.rel (0) target = $region53
    $region52: #{audio_video_inter_forward.1} parent=1 // pred_region
      %80 = dma.done [#allocation5], 8192
    $region53: #{audio_video_inter_forward.1} parent=1 // pred_fallthru
      _
    // Predicated region
    $region54: #{audio_video_inter_forward.1} parent=1 // pred_check
      _
    $region55: #{audio_video_inter_forward.1} parent=1 // pred_check_branch
      %82 = sbr.rel (0) target = $region57
    $region56: #{audio_video_inter_forward.1} parent=1 // pred_region
      %84 = dma.done [#allocation5], 4096
    $region57: #{audio_video_inter_forward.1} parent=1 // pred_fallthru
      _
    %v85 = vld [vmem:[%s0] sm:$0xff]
    %v86 = vld [vmem:[%s0 + $0x8] sm:$0xff]
    %v87 = vld [vmem:[%s0 + $0x10] sm:$0xff]
    %v88 = vld [vmem:[%s0 + $0x18] sm:$0xff]
    %v89 = vld [vmem:[%s1] sm:$0xff]
    %v90 = vld [vmem:[%s1 + $0x8] sm:$0xff]
    %v91 = vld [vmem:[%s1 + $0x10] sm:$0xff]
    %v92 = vld [vmem:[%s1 + $0x18] sm:$0xff]
    %v93 = vmul.f32 %v85, %v89
    %v94 = vmul.f32 %v86, %v90
    %v95 = vmul.f32 %v87, %v91
    %v96 = vmul.f32 %v88, %v92
    %v97 = vpack.c.bf16 %v95, %v93
    %v98 = vpack.c.bf16 %v96, %v94
    %v99 = vld [vmem:[#allocation2] sm:$0xff]
    %v100 = vld [vmem:[#allocation2 + $0x8] sm:$0xff]
    %v101 = vld [vmem:[#allocation2 + $0x10] sm:$0xff]
    %v102 = vld [vmem:[#allocation2 + $0x18] sm:$0xff]
    %v103 = vld [vmem:[#allocation2 + $0x20] sm:$0xff]
    %v104 = vld [vmem:[#allocation2 + $0x28] sm:$0xff]
    %v105 = vld [vmem:[#allocation2 + $0x30] sm:$0xff]
    %v106 = vld [vmem:[#allocation2 + $0x38] sm:$0xff]
    %v107 = vld [vmem:[#allocation2 + $0x40] sm:$0xff]
    %v108 = vld [vmem:[#allocation2 + $0x48] sm:$0xff]
    %v109 = vld [vmem:[#allocation2 + $0x50] sm:$0xff]
    %v110 = vld [vmem:[#allocation2 + $0x58] sm:$0xff]
    %v111 = vld [vmem:[#allocation2 + $0x60] sm:$0xff]
    %v112 = vld [vmem:[#allocation2 + $0x68] sm:$0xff]
    %v113 = vld [vmem:[#allocation2 + $0x70] sm:$0xff]
    %v114 = vld [vmem:[#allocation2 + $0x78] sm:$0xff]
    %v115 = vld [vmem:[#allocation2 + $0x80] sm:$0xff]
    %v116 = vld [vmem:[#allocation2 + $0x88] sm:$0xff]
    %v117 = vld [vmem:[#allocation2 + $0x90] sm:$0xff]
    %v118 = vld [vmem:[#allocation2 + $0x98] sm:$0xff]
    %v119 = vld [vmem:[#allocation2 + $0xa0] sm:$0xff]
    %v120 = vld [vmem:[#allocation2 + $0xa8] sm:$0xff]
    %v121 = vld [vmem:[#allocation2 + $0xb0] sm:$0xff]
    %v122 = vld [vmem:[#allocation2 + $0xb8] sm:$0xff]
    %v123 = vld [vmem:[#allocation2 + $0xc0] sm:$0xff]
    %v124 = vld [vmem:[#allocation2 + $0xc8] sm:$0xff]
    %v125 = vld [vmem:[#allocation2 + $0xd0] sm:$0xff]
    %v126 = vld [vmem:[#allocation2 + $0xd8] sm:$0xff]
    %v127 = vld [vmem:[#allocation2 + $0xe0] sm:$0xff]
    %v128 = vld [vmem:[#allocation2 + $0xe8] sm:$0xff]
    %v129 = vld [vmem:[#allocation2 + $0xf0] sm:$0xff]
    %v130 = vld [vmem:[#allocation2 + $0xf8] sm:$0xff]
    %v131 = vld [vmem:[%s4] sm:$0x3]
    %v133 = vperm.slane %v131, 0
    %v134 = vperm.slane %v131, 1
    %v169 = vunpack.c.l.b16 %v99
    %v170 = vunpack.c.h.b16 %v99
    %v171 = vunpack.c.l.b16 %v100
    %v172 = vunpack.c.h.b16 %v100
    %v173 = vunpack.c.l.b16 %v101
    %v174 = vunpack.c.h.b16 %v101
    %v175 = vunpack.c.l.b16 %v102
    %v176 = vunpack.c.h.b16 %v102
    %v177 = vunpack.c.l.b16 %v103
    %v178 = vunpack.c.h.b16 %v103
    %v179 = vunpack.c.l.b16 %v104
    %v180 = vunpack.c.h.b16 %v104
    %v181 = vunpack.c.l.b16 %v105
    %v182 = vunpack.c.h.b16 %v105
    %v183 = vunpack.c.l.b16 %v106
    %v184 = vunpack.c.h.b16 %v106
    %v185 = vunpack.c.l.b16 %v107
    %v186 = vunpack.c.h.b16 %v107
    %v187 = vunpack.c.l.b16 %v108
    %v188 = vunpack.c.h.b16 %v108
    %v189 = vunpack.c.l.b16 %v109
    %v190 = vunpack.c.h.b16 %v109
    %v191 = vunpack.c.l.b16 %v110
    %v192 = vunpack.c.h.b16 %v110
    %v193 = vunpack.c.l.b16 %v111
    %v194 = vunpack.c.h.b16 %v111
    %v195 = vunpack.c.l.b16 %v112
    %v196 = vunpack.c.h.b16 %v112
    %v197 = vunpack.c.l.b16 %v113
    %v198 = vunpack.c.h.b16 %v113
    %v199 = vunpack.c.l.b16 %v114
    %v200 = vunpack.c.h.b16 %v114
    %v201 = vunpack.c.l.b16 %v115
    %v202 = vunpack.c.h.b16 %v115
    %v203 = vunpack.c.l.b16 %v116
    %v204 = vunpack.c.h.b16 %v116
    %v205 = vunpack.c.l.b16 %v117
    %v206 = vunpack.c.h.b16 %v117
    %v207 = vunpack.c.l.b16 %v118
    %v208 = vunpack.c.h.b16 %v118
    %v209 = vunpack.c.l.b16 %v119
    %v210 = vunpack.c.h.b16 %v119
    %v211 = vunpack.c.l.b16 %v120
    %v212 = vunpack.c.h.b16 %v120
    %v213 = vunpack.c.l.b16 %v121
    %v214 = vunpack.c.h.b16 %v121
    %v215 = vunpack.c.l.b16 %v122
    %v216 = vunpack.c.h.b16 %v122
    %v217 = vunpack.c.l.b16 %v123
    %v218 = vunpack.c.h.b16 %v123
    %v219 = vunpack.c.l.b16 %v124
    %v220 = vunpack.c.h.b16 %v124
    %v221 = vunpack.c.l.b16 %v125
    %v222 = vunpack.c.h.b16 %v125
    %v223 = vunpack.c.l.b16 %v126
    %v224 = vunpack.c.h.b16 %v126
    %v225 = vunpack.c.l.b16 %v127
    %v226 = vunpack.c.h.b16 %v127
    %v227 = vunpack.c.l.b16 %v128
    %v228 = vunpack.c.h.b16 %v128
    %v229 = vunpack.c.l.b16 %v129
    %v230 = vunpack.c.h.b16 %v129
    %v231 = vunpack.c.l.b16 %v130
    %v232 = vunpack.c.h.b16 %v130
    %v233 = vpack.c.b16 %v171, %v169
    %v234 = vpack.c.b16 %v172, %v170
    %v235 = vpack.c.b16 %v175, %v173
    %v236 = vpack.c.b16 %v176, %v174
    %v237 = vpack.c.b16 %v179, %v177
    %v238 = vpack.c.b16 %v180, %v178
    %v239 = vpack.c.b16 %v183, %v181
    %v240 = vpack.c.b16 %v184, %v182
    %v241 = vpack.c.b16 %v187, %v185
    %v242 = vpack.c.b16 %v188, %v186
    %v243 = vpack.c.b16 %v191, %v189
    %v244 = vpack.c.b16 %v192, %v190
    %v245 = vpack.c.b16 %v195, %v193
    %v246 = vpack.c.b16 %v196, %v194
    %v247 = vpack.c.b16 %v199, %v197
    %v248 = vpack.c.b16 %v200, %v198
    %v249 = vpack.c.b16 %v203, %v201
    %v250 = vpack.c.b16 %v204, %v202
    %v251 = vpack.c.b16 %v207, %v205
    %v252 = vpack.c.b16 %v208, %v206
    %v253 = vpack.c.b16 %v211, %v209
    %v254 = vpack.c.b16 %v212, %v210
    %v255 = vpack.c.b16 %v215, %v213
    %v256 = vpack.c.b16 %v216, %v214
    %v257 = vpack.c.b16 %v219, %v217
    %v258 = vpack.c.b16 %v220, %v218
    %v259 = vpack.c.b16 %v223, %v221
    %v260 = vpack.c.b16 %v224, %v222
    %v261 = vpack.c.b16 %v227, %v225
    %v262 = vpack.c.b16 %v228, %v226
    %v263 = vpack.c.b16 %v231, %v229
    %v264 = vpack.c.b16 %v232, %v230
    %297 = vmatpush.bf16.msra.mxu0 %v247
    %298 = vmatpush.bf16.msra.mxu0 %v245
    %299 = vmatpush.bf16.msra.mxu0 %v243
    %300 = vmatpush.bf16.msra.mxu0 %v241
    %301 = vmatpush.bf16.msra.mxu0 %v239
    %302 = vmatpush.bf16.msra.mxu0 %v237
    %303 = vmatpush.bf16.msra.mxu0 %v235
    %304 = vmatpush.bf16.msra.mxu0 %v233
    %305 = vmatmul.bf16.gmra.mxu0 %v97
    %v306 = vpop.f32.mrf.mxu0
    %v307 = vadd.f32 %v133, %v306
    %v308 = vpop.f32.mrf.mxu0
    %v309 = vadd.f32 %v133, %v308
    %310 = vdwg.mxu0
    %311 = vmatpush.bf16.msra.mxu0 %v263
    %312 = vmatpush.bf16.msra.mxu0 %v261
    %313 = vmatpush.bf16.msra.mxu0 %v259
    %314 = vmatpush.bf16.msra.mxu0 %v257
    %315 = vmatpush.bf16.msra.mxu0 %v255
    %316 = vmatpush.bf16.msra.mxu0 %v253
    %317 = vmatpush.bf16.msra.mxu0 %v251
    %318 = vmatpush.bf16.msra.mxu0 %v249
    %319 = vmatmul.bf16.gmra.mxu0 %v98
    %v320 = vpop.f32.mrf.mxu0
    %v321 = vadd.f32 %v307, %v320
    %v322 = vpop.f32.mrf.mxu0
    %v323 = vadd.f32 %v309, %v322
    %324 = vdwg.mxu0
    %325 = vmatpush.bf16.msra.mxu0 %v248
    %326 = vmatpush.bf16.msra.mxu0 %v246
    %327 = vmatpush.bf16.msra.mxu0 %v244
    %328 = vmatpush.bf16.msra.mxu0 %v242
    %329 = vmatpush.bf16.msra.mxu0 %v240
    %330 = vmatpush.bf16.msra.mxu0 %v238
    %331 = vmatpush.bf16.msra.mxu0 %v236
    %332 = vmatpush.bf16.msra.mxu0 %v234
    %333 = vmatmul.bf16.gmra.mxu0 %v97
    %v334 = vpop.f32.mrf.mxu0
    %v335 = vadd.f32 %v134, %v334
    %v336 = vpop.f32.mrf.mxu0
    %v337 = vadd.f32 %v134, %v336
    %338 = vdwg.mxu0
    %339 = vmatpush.bf16.msra.mxu0 %v264
    %340 = vmatpush.bf16.msra.mxu0 %v262
    %341 = vmatpush.bf16.msra.mxu0 %v260
    %342 = vmatpush.bf16.msra.mxu0 %v258
    %343 = vmatpush.bf16.msra.mxu0 %v256
    %344 = vmatpush.bf16.msra.mxu0 %v254
    %345 = vmatpush.bf16.msra.mxu0 %v252
    %346 = vmatpush.bf16.msra.mxu0 %v250
    %347 = vmatmul.bf16.gmra.mxu0 %v98
    %v348 = vpop.f32.mrf.mxu0
    %v349 = vadd.f32 %v335, %v348
    %v350 = vpop.f32.mrf.mxu0
    %v351 = vadd.f32 %v337, %v350
    %352 = vdwg.mxu0
    %v353 = vld [vmem:[%s2] sm:$0xff]
    %v354 = vld [vmem:[%s2 + $0x8] sm:$0xff]
    %v355 = vld [vmem:[%s2 + $0x10] sm:$0xff]
    %v356 = vld [vmem:[%s2 + $0x18] sm:$0xff]
    %v357 = vld [vmem:[#allocation4] sm:$0xff]
    %v358 = vld [vmem:[#allocation4 + $0x8] sm:$0xff]
    %v359 = vld [vmem:[#allocation4 + $0x10] sm:$0xff]
    %v360 = vld [vmem:[#allocation4 + $0x18] sm:$0xff]
    %v361 = vld [vmem:[#allocation4 + $0x20] sm:$0xff]
    %v362 = vld [vmem:[#allocation4 + $0x28] sm:$0xff]
    %v363 = vld [vmem:[#allocation4 + $0x30] sm:$0xff]
    %v364 = vld [vmem:[#allocation4 + $0x38] sm:$0xff]
    %v365 = vld [vmem:[#allocation4 + $0x40] sm:$0xff]
    %v366 = vld [vmem:[#allocation4 + $0x48] sm:$0xff]
    %v367 = vld [vmem:[#allocation4 + $0x50] sm:$0xff]
    %v368 = vld [vmem:[#allocation4 + $0x58] sm:$0xff]
    %v369 = vld [vmem:[#allocation4 + $0x60] sm:$0xff]
    %v370 = vld [vmem:[#allocation4 + $0x68] sm:$0xff]
    %v371 = vld [vmem:[#allocation4 + $0x70] sm:$0xff]
    %v372 = vld [vmem:[#allocation4 + $0x78] sm:$0xff]
    %v373 = vld [vmem:[#allocation4 + $0x80] sm:$0xff]
    %v374 = vld [vmem:[#allocation4 + $0x88] sm:$0xff]
    %v375 = vld [vmem:[#allocation4 + $0x90] sm:$0xff]
    %v376 = vld [vmem:[#allocation4 + $0x98] sm:$0xff]
    %v377 = vld [vmem:[#allocation4 + $0xa0] sm:$0xff]
    %v378 = vld [vmem:[#allocation4 + $0xa8] sm:$0xff]
    %v379 = vld [vmem:[#allocation4 + $0xb0] sm:$0xff]
    %v380 = vld [vmem:[#allocation4 + $0xb8] sm:$0xff]
    %v381 = vld [vmem:[#allocation4 + $0xc0] sm:$0xff]
    %v382 = vld [vmem:[#allocation4 + $0xc8] sm:$0xff]
    %v383 = vld [vmem:[#allocation4 + $0xd0] sm:$0xff]
    %v384 = vld [vmem:[#allocation4 + $0xd8] sm:$0xff]
    %v385 = vld [vmem:[#allocation4 + $0xe0] sm:$0xff]
    %v386 = vld [vmem:[#allocation4 + $0xe8] sm:$0xff]
    %v387 = vld [vmem:[#allocation4 + $0xf0] sm:$0xff]
    %v388 = vld [vmem:[#allocation4 + $0xf8] sm:$0xff]
    %v389 = vld [vmem:[#allocation4 + $0x100] sm:$0xff]
    %v390 = vld [vmem:[#allocation4 + $0x108] sm:$0xff]
    %v391 = vld [vmem:[#allocation4 + $0x110] sm:$0xff]
    %v392 = vld [vmem:[#allocation4 + $0x118] sm:$0xff]
    %v393 = vld [vmem:[#allocation4 + $0x120] sm:$0xff]
    %v394 = vld [vmem:[#allocation4 + $0x128] sm:$0xff]
    %v395 = vld [vmem:[#allocation4 + $0x130] sm:$0xff]
    %v396 = vld [vmem:[#allocation4 + $0x138] sm:$0xff]
    %v397 = vld [vmem:[#allocation4 + $0x140] sm:$0xff]
    %v398 = vld [vmem:[#allocation4 + $0x148] sm:$0xff]
    %v399 = vld [vmem:[#allocation4 + $0x150] sm:$0xff]
    %v400 = vld [vmem:[#allocation4 + $0x158] sm:$0xff]
    %v401 = vld [vmem:[#allocation4 + $0x160] sm:$0xff]
    %v402 = vld [vmem:[#allocation4 + $0x168] sm:$0xff]
    %v403 = vld [vmem:[#allocation4 + $0x170] sm:$0xff]
    %v404 = vld [vmem:[#allocation4 + $0x178] sm:$0xff]
    %v405 = vld [vmem:[#allocation4 + $0x180] sm:$0xff]
    %v406 = vld [vmem:[#allocation4 + $0x188] sm:$0xff]
    %v407 = vld [vmem:[#allocation4 + $0x190] sm:$0xff]
    %v408 = vld [vmem:[#allocation4 + $0x198] sm:$0xff]
    %v409 = vld [vmem:[#allocation4 + $0x1a0] sm:$0xff]
    %v410 = vld [vmem:[#allocation4 + $0x1a8] sm:$0xff]
    %v411 = vld [vmem:[#allocation4 + $0x1b0] sm:$0xff]
    %v412 = vld [vmem:[#allocation4 + $0x1b8] sm:$0xff]
    %v413 = vld [vmem:[#allocation4 + $0x1c0] sm:$0xff]
    %v414 = vld [vmem:[#allocation4 + $0x1c8] sm:$0xff]
    %v415 = vld [vmem:[#allocation4 + $0x1d0] sm:$0xff]
    %v416 = vld [vmem:[#allocation4 + $0x1d8] sm:$0xff]
    %v417 = vld [vmem:[#allocation4 + $0x1e0] sm:$0xff]
    %v418 = vld [vmem:[#allocation4 + $0x1e8] sm:$0xff]
    %v419 = vld [vmem:[#allocation4 + $0x1f0] sm:$0xff]
    %v420 = vld [vmem:[#allocation4 + $0x1f8] sm:$0xff]
    %v421 = vld [vmem:[%s6] sm:$0xf]
    %v423 = vperm.slane %v421, 0
    %v424 = vperm.slane %v421, 1
    %v425 = vperm.slane %v421, 2
    %v426 = vperm.slane %v421, 3
    %v435 = vunpack.c.l.b16 %v353
    %v436 = vunpack.c.h.b16 %v353
    %v437 = vunpack.c.l.b16 %v354
    %v438 = vunpack.c.h.b16 %v354
    %v439 = vunpack.c.l.b16 %v355
    %v440 = vunpack.c.h.b16 %v355
    %v441 = vunpack.c.l.b16 %v356
    %v442 = vunpack.c.h.b16 %v356
    %v443 = vpack.c.b16 %v437, %v435
    %v444 = vpack.c.b16 %v438, %v436
    %v445 = vpack.c.b16 %v441, %v439
    %v446 = vpack.c.b16 %v442, %v440
    %v515 = vunpack.c.l.b16 %v357
    %v516 = vunpack.c.h.b16 %v357
    %v517 = vunpack.c.l.b16 %v358
    %v518 = vunpack.c.h.b16 %v358
    %v519 = vunpack.c.l.b16 %v359
    %v520 = vunpack.c.h.b16 %v359
    %v521 = vunpack.c.l.b16 %v360
    %v522 = vunpack.c.h.b16 %v360
    %v523 = vunpack.c.l.b16 %v361
    %v524 = vunpack.c.h.b16 %v361
    %v525 = vunpack.c.l.b16 %v362
    %v526 = vunpack.c.h.b16 %v362
    %v527 = vunpack.c.l.b16 %v363
    %v528 = vunpack.c.h.b16 %v363
    %v529 = vunpack.c.l.b16 %v364
    %v530 = vunpack.c.h.b16 %v364
    %v531 = vunpack.c.l.b16 %v365
    %v532 = vunpack.c.h.b16 %v365
    %v533 = vunpack.c.l.b16 %v366
    %v534 = vunpack.c.h.b16 %v366
    %v535 = vunpack.c.l.b16 %v367
    %v536 = vunpack.c.h.b16 %v367
    %v537 = vunpack.c.l.b16 %v368
    %v538 = vunpack.c.h.b16 %v368
    %v539 = vunpack.c.l.b16 %v369
    %v540 = vunpack.c.h.b16 %v369
    %v541 = vunpack.c.l.b16 %v370
    %v542 = vunpack.c.h.b16 %v370
    %v543 = vunpack.c.l.b16 %v371
    %v544 = vunpack.c.h.b16 %v371
    %v545 = vunpack.c.l.b16 %v372
    %v546 = vunpack.c.h.b16 %v372
    %v547 = vunpack.c.l.b16 %v373
    %v548 = vunpack.c.h.b16 %v373
    %v549 = vunpack.c.l.b16 %v374
    %v550 = vunpack.c.h.b16 %v374
    %v551 = vunpack.c.l.b16 %v375
    %v552 = vunpack.c.h.b16 %v375
    %v553 = vunpack.c.l.b16 %v376
    %v554 = vunpack.c.h.b16 %v376
    %v555 = vunpack.c.l.b16 %v377
    %v556 = vunpack.c.h.b16 %v377
    %v557 = vunpack.c.l.b16 %v378
    %v558 = vunpack.c.h.b16 %v378
    %v559 = vunpack.c.l.b16 %v379
    %v560 = vunpack.c.h.b16 %v379
    %v561 = vunpack.c.l.b16 %v380
    %v562 = vunpack.c.h.b16 %v380
    %v563 = vunpack.c.l.b16 %v381
    %v564 = vunpack.c.h.b16 %v381
    %v565 = vunpack.c.l.b16 %v382
    %v566 = vunpack.c.h.b16 %v382
    %v567 = vunpack.c.l.b16 %v383
    %v568 = vunpack.c.h.b16 %v383
    %v569 = vunpack.c.l.b16 %v384
    %v570 = vunpack.c.h.b16 %v384
    %v571 = vunpack.c.l.b16 %v385
    %v572 = vunpack.c.h.b16 %v385
    %v573 = vunpack.c.l.b16 %v386
    %v574 = vunpack.c.h.b16 %v386
    %v575 = vunpack.c.l.b16 %v387
    %v576 = vunpack.c.h.b16 %v387
    %v577 = vunpack.c.l.b16 %v388
    %v578 = vunpack.c.h.b16 %v388
    %v579 = vunpack.c.l.b16 %v389
    %v580 = vunpack.c.h.b16 %v389
    %v581 = vunpack.c.l.b16 %v390
    %v582 = vunpack.c.h.b16 %v390
    %v583 = vunpack.c.l.b16 %v391
    %v584 = vunpack.c.h.b16 %v391
    %v585 = vunpack.c.l.b16 %v392
    %v586 = vunpack.c.h.b16 %v392
    %v587 = vunpack.c.l.b16 %v393
    %v588 = vunpack.c.h.b16 %v393
    %v589 = vunpack.c.l.b16 %v394
    %v590 = vunpack.c.h.b16 %v394
    %v591 = vunpack.c.l.b16 %v395
    %v592 = vunpack.c.h.b16 %v395
    %v593 = vunpack.c.l.b16 %v396
    %v594 = vunpack.c.h.b16 %v396
    %v595 = vunpack.c.l.b16 %v397
    %v596 = vunpack.c.h.b16 %v397
    %v597 = vunpack.c.l.b16 %v398
    %v598 = vunpack.c.h.b16 %v398
    %v599 = vunpack.c.l.b16 %v399
    %v600 = vunpack.c.h.b16 %v399
    %v601 = vunpack.c.l.b16 %v400
    %v602 = vunpack.c.h.b16 %v400
    %v603 = vunpack.c.l.b16 %v401
    %v604 = vunpack.c.h.b16 %v401
    %v605 = vunpack.c.l.b16 %v402
    %v606 = vunpack.c.h.b16 %v402
    %v607 = vunpack.c.l.b16 %v403
    %v608 = vunpack.c.h.b16 %v403
    %v609 = vunpack.c.l.b16 %v404
    %v610 = vunpack.c.h.b16 %v404
    %v611 = vunpack.c.l.b16 %v405
    %v612 = vunpack.c.h.b16 %v405
    %v613 = vunpack.c.l.b16 %v406
    %v614 = vunpack.c.h.b16 %v406
    %v615 = vunpack.c.l.b16 %v407
    %v616 = vunpack.c.h.b16 %v407
    %v617 = vunpack.c.l.b16 %v408
    %v618 = vunpack.c.h.b16 %v408
    %v619 = vunpack.c.l.b16 %v409
    %v620 = vunpack.c.h.b16 %v409
    %v621 = vunpack.c.l.b16 %v410
    %v622 = vunpack.c.h.b16 %v410
    %v623 = vunpack.c.l.b16 %v411
    %v624 = vunpack.c.h.b16 %v411
    %v625 = vunpack.c.l.b16 %v412
    %v626 = vunpack.c.h.b16 %v412
    %v627 = vunpack.c.l.b16 %v413
    %v628 = vunpack.c.h.b16 %v413
    %v629 = vunpack.c.l.b16 %v414
    %v630 = vunpack.c.h.b16 %v414
    %v631 = vunpack.c.l.b16 %v415
    %v632 = vunpack.c.h.b16 %v415
    %v633 = vunpack.c.l.b16 %v416
    %v634 = vunpack.c.h.b16 %v416
    %v635 = vunpack.c.l.b16 %v417
    %v636 = vunpack.c.h.b16 %v417
    %v637 = vunpack.c.l.b16 %v418
    %v638 = vunpack.c.h.b16 %v418
    %v639 = vunpack.c.l.b16 %v419
    %v640 = vunpack.c.h.b16 %v419
    %v641 = vunpack.c.l.b16 %v420
    %v642 = vunpack.c.h.b16 %v420
    %v643 = vpack.c.b16 %v519, %v515
    %v644 = vpack.c.b16 %v520, %v516
    %v645 = vpack.c.b16 %v521, %v517
    %v646 = vpack.c.b16 %v522, %v518
    %v647 = vpack.c.b16 %v527, %v523
    %v648 = vpack.c.b16 %v528, %v524
    %v649 = vpack.c.b16 %v529, %v525
    %v650 = vpack.c.b16 %v530, %v526
    %v651 = vpack.c.b16 %v535, %v531
    %v652 = vpack.c.b16 %v536, %v532
    %v653 = vpack.c.b16 %v537, %v533
    %v654 = vpack.c.b16 %v538, %v534
    %v655 = vpack.c.b16 %v543, %v539
    %v656 = vpack.c.b16 %v544, %v540
    %v657 = vpack.c.b16 %v545, %v541
    %v658 = vpack.c.b16 %v546, %v542
    %v659 = vpack.c.b16 %v551, %v547
    %v660 = vpack.c.b16 %v552, %v548
    %v661 = vpack.c.b16 %v553, %v549
    %v662 = vpack.c.b16 %v554, %v550
    %v663 = vpack.c.b16 %v559, %v555
    %v664 = vpack.c.b16 %v560, %v556
    %v665 = vpack.c.b16 %v561, %v557
    %v666 = vpack.c.b16 %v562, %v558
    %v667 = vpack.c.b16 %v567, %v563
    %v668 = vpack.c.b16 %v568, %v564
    %v669 = vpack.c.b16 %v569, %v565
    %v670 = vpack.c.b16 %v570, %v566
    %v671 = vpack.c.b16 %v575, %v571
    %v672 = vpack.c.b16 %v576, %v572
    %v673 = vpack.c.b16 %v577, %v573
    %v674 = vpack.c.b16 %v578, %v574
    %v675 = vpack.c.b16 %v583, %v579
    %v676 = vpack.c.b16 %v584, %v580
    %v677 = vpack.c.b16 %v585, %v581
    %v678 = vpack.c.b16 %v586, %v582
    %v679 = vpack.c.b16 %v591, %v587
    %v680 = vpack.c.b16 %v592, %v588
    %v681 = vpack.c.b16 %v593, %v589
    %v682 = vpack.c.b16 %v594, %v590
    %v683 = vpack.c.b16 %v599, %v595
    %v684 = vpack.c.b16 %v600, %v596
    %v685 = vpack.c.b16 %v601, %v597
    %v686 = vpack.c.b16 %v602, %v598
    %v687 = vpack.c.b16 %v607, %v603
    %v688 = vpack.c.b16 %v608, %v604
    %v689 = vpack.c.b16 %v609, %v605
    %v690 = vpack.c.b16 %v610, %v606
    %v691 = vpack.c.b16 %v615, %v611
    %v692 = vpack.c.b16 %v616, %v612
    %v693 = vpack.c.b16 %v617, %v613
    %v694 = vpack.c.b16 %v618, %v614
    %v695 = vpack.c.b16 %v623, %v619
    %v696 = vpack.c.b16 %v624, %v620
    %v697 = vpack.c.b16 %v625, %v621
    %v698 = vpack.c.b16 %v626, %v622
    %v699 = vpack.c.b16 %v631, %v627
    %v700 = vpack.c.b16 %v632, %v628
    %v701 = vpack.c.b16 %v633, %v629
    %v702 = vpack.c.b16 %v634, %v630
    %v703 = vpack.c.b16 %v639, %v635
    %v704 = vpack.c.b16 %v640, %v636
    %v705 = vpack.c.b16 %v641, %v637
    %v706 = vpack.c.b16 %v642, %v638
    %771 = vmatpush.bf16.msra.mxu0 %v671
    %772 = vmatpush.bf16.msra.mxu0 %v667
    %773 = vmatpush.bf16.msra.mxu0 %v663
    %774 = vmatpush.bf16.msra.mxu0 %v659
    %775 = vmatpush.bf16.msra.mxu0 %v655
    %776 = vmatpush.bf16.msra.mxu0 %v651
    %777 = vmatpush.bf16.msra.mxu0 %v647
    %778 = vmatpush.bf16.msra.mxu0 %v643
    %779 = vmatmul.bf16.gmra.mxu0 %v443
    %v780 = vpop.f32.mrf.mxu0
    %v781 = vadd.f32 %v423, %v780
    %v782 = vpop.f32.mrf.mxu0
    %v783 = vadd.f32 %v423, %v782
    %784 = vmatmul.bf16.gmra.mxu0 %v445
    %v785 = vpop.f32.mrf.mxu0
    %v786 = vadd.f32 %v423, %v785
    %v787 = vpop.f32.mrf.mxu0
    %v788 = vadd.f32 %v423, %v787
    %789 = vdwg.mxu0
    %790 = vmatpush.bf16.msra.mxu0 %v703
    %791 = vmatpush.bf16.msra.mxu0 %v699
    %792 = vmatpush.bf16.msra.mxu0 %v695
    %793 = vmatpush.bf16.msra.mxu0 %v691
    %794 = vmatpush.bf16.msra.mxu0 %v687
    %795 = vmatpush.bf16.msra.mxu0 %v683
    %796 = vmatpush.bf16.msra.mxu0 %v679
    %797 = vmatpush.bf16.msra.mxu0 %v675
    %798 = vmatmul.bf16.gmra.mxu0 %v444
    %v799 = vpop.f32.mrf.mxu0
    %v800 = vadd.f32 %v781, %v799
    %v801 = vpop.f32.mrf.mxu0
    %v802 = vadd.f32 %v783, %v801
    %803 = vmatmul.bf16.gmra.mxu0 %v446
    %v804 = vpop.f32.mrf.mxu0
    %v805 = vadd.f32 %v786, %v804
    %v806 = vpop.f32.mrf.mxu0
    %v807 = vadd.f32 %v788, %v806
    %808 = vdwg.mxu0
    %809 = vmatpush.bf16.msra.mxu0 %v672
    %810 = vmatpush.bf16.msra.mxu0 %v668
    %811 = vmatpush.bf16.msra.mxu0 %v664
    %812 = vmatpush.bf16.msra.mxu0 %v660
    %813 = vmatpush.bf16.msra.mxu0 %v656
    %814 = vmatpush.bf16.msra.mxu0 %v652
    %815 = vmatpush.bf16.msra.mxu0 %v648
    %816 = vmatpush.bf16.msra.mxu0 %v644
    %817 = vmatmul.bf16.gmra.mxu0 %v443
    %v818 = vpop.f32.mrf.mxu0
    %v819 = vadd.f32 %v424, %v818
    %v820 = vpop.f32.mrf.mxu0
    %v821 = vadd.f32 %v424, %v820
    %822 = vmatmul.bf16.gmra.mxu0 %v445
    %v823 = vpop.f32.mrf.mxu0
    %v824 = vadd.f32 %v424, %v823
    %v825 = vpop.f32.mrf.mxu0
    %v826 = vadd.f32 %v424, %v825
    %827 = vdwg.mxu0
    %828 = vmatpush.bf16.msra.mxu0 %v704
    %829 = vmatpush.bf16.msra.mxu0 %v700
    %830 = vmatpush.bf16.msra.mxu0 %v696
    %831 = vmatpush.bf16.msra.mxu0 %v692
    %832 = vmatpush.bf16.msra.mxu0 %v688
    %833 = vmatpush.bf16.msra.mxu0 %v684
    %834 = vmatpush.bf16.msra.mxu0 %v680
    %835 = vmatpush.bf16.msra.mxu0 %v676
    %836 = vmatmul.bf16.gmra.mxu0 %v444
    %v837 = vpop.f32.mrf.mxu0
    %v838 = vadd.f32 %v819, %v837
    %v839 = vpop.f32.mrf.mxu0
    %v840 = vadd.f32 %v821, %v839
    %841 = vmatmul.bf16.gmra.mxu0 %v446
    %v842 = vpop.f32.mrf.mxu0
    %v843 = vadd.f32 %v824, %v842
    %v844 = vpop.f32.mrf.mxu0
    %v845 = vadd.f32 %v826, %v844
    %846 = vdwg.mxu0
    %847 = vmatpush.bf16.msra.mxu0 %v673
    %848 = vmatpush.bf16.msra.mxu0 %v669
    %849 = vmatpush.bf16.msra.mxu0 %v665
    %850 = vmatpush.bf16.msra.mxu0 %v661
    %851 = vmatpush.bf16.msra.mxu0 %v657
    %852 = vmatpush.bf16.msra.mxu0 %v653
    %853 = vmatpush.bf16.msra.mxu0 %v649
    %854 = vmatpush.bf16.msra.mxu0 %v645
    %855 = vmatmul.bf16.gmra.mxu0 %v443
    %v856 = vpop.f32.mrf.mxu0
    %v857 = vadd.f32 %v425, %v856
    %v858 = vpop.f32.mrf.mxu0
    %v859 = vadd.f32 %v425, %v858
    %860 = vmatmul.bf16.gmra.mxu0 %v445
    %v861 = vpop.f32.mrf.mxu0
    %v862 = vadd.f32 %v425, %v861
    %v863 = vpop.f32.mrf.mxu0
    %v864 = vadd.f32 %v425, %v863
    %865 = vdwg.mxu0
    %866 = vmatpush.bf16.msra.mxu0 %v705
    %867 = vmatpush.bf16.msra.mxu0 %v701
    %868 = vmatpush.bf16.msra.mxu0 %v697
    %869 = vmatpush.bf16.msra.mxu0 %v693
    %870 = vmatpush.bf16.msra.mxu0 %v689
    %871 = vmatpush.bf16.msra.mxu0 %v685
    %872 = vmatpush.bf16.msra.mxu0 %v681
    %873 = vmatpush.bf16.msra.mxu0 %v677
    %874 = vmatmul.bf16.gmra.mxu0 %v444
    %v875 = vpop.f32.mrf.mxu0
    %v876 = vadd.f32 %v857, %v875
    %v877 = vpop.f32.mrf.mxu0
    %v878 = vadd.f32 %v859, %v877
    %879 = vmatmul.bf16.gmra.mxu0 %v446
    %v880 = vpop.f32.mrf.mxu0
    %v881 = vadd.f32 %v862, %v880
    %v882 = vpop.f32.mrf.mxu0
    %v883 = vadd.f32 %v864, %v882
    %884 = vdwg.mxu0
    %885 = vmatpush.bf16.msra.mxu0 %v674
    %886 = vmatpush.bf16.msra.mxu0 %v670
    %887 = vmatpush.bf16.msra.mxu0 %v666
    %888 = vmatpush.bf16.msra.mxu0 %v662
    %889 = vmatpush.bf16.msra.mxu0 %v658
    %890 = vmatpush.bf16.msra.mxu0 %v654
    %891 = vmatpush.bf16.msra.mxu0 %v650
    %892 = vmatpush.bf16.msra.mxu0 %v646
    %893 = vmatmul.bf16.gmra.mxu0 %v443
    %v894 = vpop.f32.mrf.mxu0
    %v895 = vadd.f32 %v426, %v894
    %v896 = vpop.f32.mrf.mxu0
    %v897 = vadd.f32 %v426, %v896
    %898 = vmatmul.bf16.gmra.mxu0 %v445
    %v899 = vpop.f32.mrf.mxu0
    %v900 = vadd.f32 %v426, %v899
    %v901 = vpop.f32.mrf.mxu0
    %v902 = vadd.f32 %v426, %v901
    %903 = vdwg.mxu0
    %904 = vmatpush.bf16.msra.mxu0 %v706
    %905 = vmatpush.bf16.msra.mxu0 %v702
    %906 = vmatpush.bf16.msra.mxu0 %v698
    %907 = vmatpush.bf16.msra.mxu0 %v694
    %908 = vmatpush.bf16.msra.mxu0 %v690
    %909 = vmatpush.bf16.msra.mxu0 %v686
    %910 = vmatpush.bf16.msra.mxu0 %v682
    %911 = vmatpush.bf16.msra.mxu0 %v678
    %912 = vmatmul.bf16.gmra.mxu0 %v444
    %v913 = vpop.f32.mrf.mxu0
    %v914 = vadd.f32 %v895, %v913
    %v915 = vpop.f32.mrf.mxu0
    %v916 = vadd.f32 %v897, %v915
    %917 = vmatmul.bf16.gmra.mxu0 %v446
    %v918 = vpop.f32.mrf.mxu0
    %v919 = vadd.f32 %v900, %v918
    %v920 = vpop.f32.mrf.mxu0
    %v921 = vadd.f32 %v902, %v920
    %922 = vdwg.mxu0
    %vm923 = vcmask 523264
    %v925 = vsel %vm923, %v321, 0
    %v928 = vsel %vm923, %v800, 0
    %v931 = vsel %vm923, %v802, 0
    %933 = vmatpush.xpose.msra.mxu0 0.0
    %934 = vmatpush.xpose.msra.mxu0 0.0
    %935 = vmatpush.xpose.msra.mxu0 0.0
    %936 = vmatpush.xpose.msra.mxu0 0.0
    %937 = vmatpush.xpose.msra.mxu0 0.0
    %938 = vmatpush.xpose.msra.mxu0 0.0
    %939 = vmatpush.xpose.msra.mxu0 0.0
    %940 = vmatpush.xpose.msra.mxu0 0.0
    %941 = vmatpush.xpose.msra.mxu0 0.0
    %942 = vmatpush.xpose.msra.mxu0 0.0
    %943 = vmatpush.xpose.msra.mxu0 0.0
    %944 = vmatpush.xpose.msra.mxu0 0.0
    %945 = vmatpush.xpose.msra.mxu0 0.0
    %946 = vmatpush.xpose.msra.mxu0 0.0
    %947 = vmatpush.xpose.msra.mxu0 %v931
    %948 = vmatpush.xpose.msra.mxu0 %v928
    %949 = vmatmul.f32.gmra.mxu0 %v925
    %v950 = vpop.f32.mrf.mxu0
    %v951 = vadd.f32 0.0, %v950
    %952 = vdwg.mxu0
    %vm953 = vcmask 130048
    %v954 = vsel %vm953, %v951, -inf
    %955 = vmax.xlane.f32.xlu0 %v954
    %v956 = vpop.xlane.xlu0 %955
    %v957 = vsub.f32 %v951, %v956
    %v958 = vmul.f32 %v957, 1.442695
    %v959 = vpow.pop %v958
    %v960 = vsel %vm953, %v959, 0.0
    %961 = vadd.xlane.f32.xlu0 %v960
    %v962 = vpop.xlane.xlu0 %961
    %v963 = vrcp.pop %v962
    %v964 = vmul.f32 %v959, %v963
    %v966 = vsel %vm953, %v964, 0
    %968 = vmatpush.msra.mxu0 0.0
    %969 = vmatpush.msra.mxu0 0.0
    %970 = vmatpush.msra.mxu0 0.0
    %971 = vmatpush.msra.mxu0 0.0
    %972 = vmatpush.msra.mxu0 0.0
    %973 = vmatpush.msra.mxu0 0.0
    %974 = vmatpush.msra.mxu0 0.0
    %975 = vmatpush.msra.mxu0 0.0
    %976 = vmatpush.msra.mxu0 0.0
    %977 = vmatpush.msra.mxu0 0.0
    %978 = vmatpush.msra.mxu0 0.0
    %979 = vmatpush.msra.mxu0 0.0
    %980 = vmatpush.msra.mxu0 0.0
    %981 = vmatpush.msra.mxu0 0.0
    %982 = vmatpush.msra.mxu0 %v878
    %983 = vmatpush.msra.mxu0 %v876
    %984 = vmatmul.f32.gmra.mxu0 %v966
    %v985 = vpop.f32.mrf.mxu0
    %v986 = vadd.f32 0.0, %v985
    %987 = vdwg.mxu0
    %988 = vrot.lane.b32.xlu0 %v321, 64
    %v989 = vpop.permute.xlu0 %988
    %990 = vrot.lane.b32.xlu0 %v800, 64
    %v991 = vpop.permute.xlu0 %990
    %992 = vrot.lane.b32.xlu0 %v802, 64
    %v993 = vpop.permute.xlu0 %992
    %v994 = vsel %vm923, %v989, 0
    %v996 = vsel %vm923, %v991, 0
    %v998 = vsel %vm923, %v993, 0
    %1000 = vmatpush.xpose.msra.mxu0 0.0
    %1001 = vmatpush.xpose.msra.mxu0 0.0
    %1002 = vmatpush.xpose.msra.mxu0 0.0
    %1003 = vmatpush.xpose.msra.mxu0 0.0
    %1004 = vmatpush.xpose.msra.mxu0 0.0
    %1005 = vmatpush.xpose.msra.mxu0 0.0
    %1006 = vmatpush.xpose.msra.mxu0 0.0
    %1007 = vmatpush.xpose.msra.mxu0 0.0
    %1008 = vmatpush.xpose.msra.mxu0 0.0
    %1009 = vmatpush.xpose.msra.mxu0 0.0
    %1010 = vmatpush.xpose.msra.mxu0 0.0
    %1011 = vmatpush.xpose.msra.mxu0 0.0
    %1012 = vmatpush.xpose.msra.mxu0 0.0
    %1013 = vmatpush.xpose.msra.mxu0 0.0
    %1014 = vmatpush.xpose.msra.mxu0 %v998
    %1015 = vmatpush.xpose.msra.mxu0 %v996
    %1016 = vmatmul.f32.gmra.mxu0 %v994
    %v1017 = vpop.f32.mrf.mxu0
    %v1018 = vadd.f32 0.0, %v1017
    %1019 = vdwg.mxu0
    %v1020 = vsel %vm953, %v1018, -inf
    %1021 = vmax.xlane.f32.xlu0 %v1020
    %v1022 = vpop.xlane.xlu0 %1021
    %v1023 = vsub.f32 %v1018, %v1022
    %v1024 = vmul.f32 %v1023, 1.442695
    %v1025 = vpow.pop %v1024
    %v1026 = vsel %vm953, %v1025, 0.0
    %1027 = vadd.xlane.f32.xlu0 %v1026
    %v1028 = vpop.xlane.xlu0 %1027
    %v1029 = vrcp.pop %v1028
    %v1030 = vmul.f32 %v1025, %v1029
    %1033 = vrot.lane.b32.xlu0 %v876, 64
    %v1034 = vpop.permute.xlu0 %1033
    %1035 = vrot.lane.b32.xlu0 %v878, 64
    %v1036 = vpop.permute.xlu0 %1035
    %v1040 = vsel %vm953, %v1030, 0
    %1042 = vmatpush.msra.mxu0 0.0
    %1043 = vmatpush.msra.mxu0 0.0
    %1044 = vmatpush.msra.mxu0 0.0
    %1045 = vmatpush.msra.mxu0 0.0
    %1046 = vmatpush.msra.mxu0 0.0
    %1047 = vmatpush.msra.mxu0 0.0
    %1048 = vmatpush.msra.mxu0 0.0
    %1049 = vmatpush.msra.mxu0 0.0
    %1050 = vmatpush.msra.mxu0 0.0
    %1051 = vmatpush.msra.mxu0 0.0
    %1052 = vmatpush.msra.mxu0 0.0
    %1053 = vmatpush.msra.mxu0 0.0
    %1054 = vmatpush.msra.mxu0 0.0
    %1055 = vmatpush.msra.mxu0 0.0
    %1056 = vmatpush.msra.mxu0 %v1036
    %1057 = vmatpush.msra.mxu0 %v1034
    %1058 = vmatmul.f32.gmra.mxu0 %v1040
    %v1059 = vpop.f32.mrf.mxu0
    %v1060 = vadd.f32 0.0, %v1059
    %1061 = vdwg.mxu0
    %v1063 = vsel %vm923, %v349, 0
    %v1066 = vsel %vm923, %v838, 0
    %v1069 = vsel %vm923, %v840, 0
    %1071 = vmatpush.xpose.msra.mxu0 0.0
    %1072 = vmatpush.xpose.msra.mxu0 0.0
    %1073 = vmatpush.xpose.msra.mxu0 0.0
    %1074 = vmatpush.xpose.msra.mxu0 0.0
    %1075 = vmatpush.xpose.msra.mxu0 0.0
    %1076 = vmatpush.xpose.msra.mxu0 0.0
    %1077 = vmatpush.xpose.msra.mxu0 0.0
    %1078 = vmatpush.xpose.msra.mxu0 0.0
    %1079 = vmatpush.xpose.msra.mxu0 0.0
    %1080 = vmatpush.xpose.msra.mxu0 0.0
    %1081 = vmatpush.xpose.msra.mxu0 0.0
    %1082 = vmatpush.xpose.msra.mxu0 0.0
    %1083 = vmatpush.xpose.msra.mxu0 0.0
    %1084 = vmatpush.xpose.msra.mxu0 0.0
    %1085 = vmatpush.xpose.msra.mxu0 %v1069
    %1086 = vmatpush.xpose.msra.mxu0 %v1066
    %1087 = vmatmul.f32.gmra.mxu0 %v1063
    %v1088 = vpop.f32.mrf.mxu0
    %v1089 = vadd.f32 0.0, %v1088
    %1090 = vdwg.mxu0
    %v1091 = vsel %vm953, %v1089, -inf
    %1092 = vmax.xlane.f32.xlu0 %v1091
    %v1093 = vpop.xlane.xlu0 %1092
    %v1094 = vsub.f32 %v1089, %v1093
    %v1095 = vmul.f32 %v1094, 1.442695
    %v1096 = vpow.pop %v1095
    %v1097 = vsel %vm953, %v1096, 0.0
    %1098 = vadd.xlane.f32.xlu0 %v1097
    %v1099 = vpop.xlane.xlu0 %1098
    %v1100 = vrcp.pop %v1099
    %v1101 = vmul.f32 %v1096, %v1100
    %v1103 = vsel %vm953, %v1101, 0
    %1105 = vmatpush.msra.mxu0 0.0
    %1106 = vmatpush.msra.mxu0 0.0
    %1107 = vmatpush.msra.mxu0 0.0
    %1108 = vmatpush.msra.mxu0 0.0
    %1109 = vmatpush.msra.mxu0 0.0
    %1110 = vmatpush.msra.mxu0 0.0
    %1111 = vmatpush.msra.mxu0 0.0
    %1112 = vmatpush.msra.mxu0 0.0
    %1113 = vmatpush.msra.mxu0 0.0
    %1114 = vmatpush.msra.mxu0 0.0
    %1115 = vmatpush.msra.mxu0 0.0
    %1116 = vmatpush.msra.mxu0 0.0
    %1117 = vmatpush.msra.mxu0 0.0
    %1118 = vmatpush.msra.mxu0 0.0
    %1119 = vmatpush.msra.mxu0 %v916
    %1120 = vmatpush.msra.mxu0 %v914
    %1121 = vmatmul.f32.gmra.mxu0 %v1103
    %v1122 = vpop.f32.mrf.mxu0
    %v1123 = vadd.f32 0.0, %v1122
    %1124 = vdwg.mxu0
    %1125 = vrot.lane.b32.xlu0 %v349, 64
    %v1126 = vpop.permute.xlu0 %1125
    %1127 = vrot.lane.b32.xlu0 %v838, 64
    %v1128 = vpop.permute.xlu0 %1127
    %1129 = vrot.lane.b32.xlu0 %v840, 64
    %v1130 = vpop.permute.xlu0 %1129
    %v1131 = vsel %vm923, %v1126, 0
    %v1133 = vsel %vm923, %v1128, 0
    %v1135 = vsel %vm923, %v1130, 0
    %1137 = vmatpush.xpose.msra.mxu0 0.0
    %1138 = vmatpush.xpose.msra.mxu0 0.0
    %1139 = vmatpush.xpose.msra.mxu0 0.0
    %1140 = vmatpush.xpose.msra.mxu0 0.0
    %1141 = vmatpush.xpose.msra.mxu0 0.0
    %1142 = vmatpush.xpose.msra.mxu0 0.0
    %1143 = vmatpush.xpose.msra.mxu0 0.0
    %1144 = vmatpush.xpose.msra.mxu0 0.0
    %1145 = vmatpush.xpose.msra.mxu0 0.0
    %1146 = vmatpush.xpose.msra.mxu0 0.0
    %1147 = vmatpush.xpose.msra.mxu0 0.0
    %1148 = vmatpush.xpose.msra.mxu0 0.0
    %1149 = vmatpush.xpose.msra.mxu0 0.0
    %1150 = vmatpush.xpose.msra.mxu0 0.0
    %1151 = vmatpush.xpose.msra.mxu0 %v1135
    %1152 = vmatpush.xpose.msra.mxu0 %v1133
    %1153 = vmatmul.f32.gmra.mxu0 %v1131
    %v1154 = vpop.f32.mrf.mxu0
    %v1155 = vadd.f32 0.0, %v1154
    %1156 = vdwg.mxu0
    %v1157 = vsel %vm953, %v1155, -inf
    %1158 = vmax.xlane.f32.xlu0 %v1157
    %v1159 = vpop.xlane.xlu0 %1158
    %v1160 = vsub.f32 %v1155, %v1159
    %v1161 = vmul.f32 %v1160, 1.442695
    %v1162 = vpow.pop %v1161
    %v1163 = vsel %vm953, %v1162, 0.0
    %1164 = vadd.xlane.f32.xlu0 %v1163
    %v1165 = vpop.xlane.xlu0 %1164
    %v1166 = vrcp.pop %v1165
    %v1167 = vmul.f32 %v1162, %v1166
    %1170 = vrot.lane.b32.xlu0 %v914, 64
    %v1171 = vpop.permute.xlu0 %1170
    %1172 = vrot.lane.b32.xlu0 %v916, 64
    %v1173 = vpop.permute.xlu0 %1172
    %v1177 = vsel %vm953, %v1167, 0
    %1179 = vmatpush.msra.mxu0 0.0
    %1180 = vmatpush.msra.mxu0 0.0
    %1181 = vmatpush.msra.mxu0 0.0
    %1182 = vmatpush.msra.mxu0 0.0
    %1183 = vmatpush.msra.mxu0 0.0
    %1184 = vmatpush.msra.mxu0 0.0
    %1185 = vmatpush.msra.mxu0 0.0
    %1186 = vmatpush.msra.mxu0 0.0
    %1187 = vmatpush.msra.mxu0 0.0
    %1188 = vmatpush.msra.mxu0 0.0
    %1189 = vmatpush.msra.mxu0 0.0
    %1190 = vmatpush.msra.mxu0 0.0
    %1191 = vmatpush.msra.mxu0 0.0
    %1192 = vmatpush.msra.mxu0 0.0
    %1193 = vmatpush.msra.mxu0 %v1173
    %1194 = vmatpush.msra.mxu0 %v1171
    %1195 = vmatmul.f32.gmra.mxu0 %v1177
    %v1196 = vpop.f32.mrf.mxu0
    %v1197 = vadd.f32 0.0, %v1196
    %1198 = vdwg.mxu0
    %1200 = vrot.lane.b32.xlu0 %v1060, 64
    %v1201 = vpop.permute.xlu0 %1200
    %1204 = vrot.lane.b32.xlu0 %v1197, 64
    %v1205 = vpop.permute.xlu0 %1204
    %v1207 = vsel %vm923, %v986, %v1201
    %v1208 = vsel %vm923, %v1123, %v1205
    %v1210 = vsel %vm923, %v323, 0
    %v1213 = vsel %vm923, %v805, 0
    %v1216 = vsel %vm923, %v807, 0
    %1218 = vmatpush.xpose.msra.mxu0 0.0
    %1219 = vmatpush.xpose.msra.mxu0 0.0
    %1220 = vmatpush.xpose.msra.mxu0 0.0
    %1221 = vmatpush.xpose.msra.mxu0 0.0
    %1222 = vmatpush.xpose.msra.mxu0 0.0
    %1223 = vmatpush.xpose.msra.mxu0 0.0
    %1224 = vmatpush.xpose.msra.mxu0 0.0
    %1225 = vmatpush.xpose.msra.mxu0 0.0
    %1226 = vmatpush.xpose.msra.mxu0 0.0
    %1227 = vmatpush.xpose.msra.mxu0 0.0
    %1228 = vmatpush.xpose.msra.mxu0 0.0
    %1229 = vmatpush.xpose.msra.mxu0 0.0
    %1230 = vmatpush.xpose.msra.mxu0 0.0
    %1231 = vmatpush.xpose.msra.mxu0 0.0
    %1232 = vmatpush.xpose.msra.mxu0 %v1216
    %1233 = vmatpush.xpose.msra.mxu0 %v1213
    %1234 = vmatmul.f32.gmra.mxu0 %v1210
    %v1235 = vpop.f32.mrf.mxu0
    %v1236 = vadd.f32 0.0, %v1235
    %1237 = vdwg.mxu0
    %v1238 = vsel %vm953, %v1236, -inf
    %1239 = vmax.xlane.f32.xlu0 %v1238
    %v1240 = vpop.xlane.xlu0 %1239
    %v1241 = vsub.f32 %v1236, %v1240
    %v1242 = vmul.f32 %v1241, 1.442695
    %v1243 = vpow.pop %v1242
    %v1244 = vsel %vm953, %v1243, 0.0
    %1245 = vadd.xlane.f32.xlu0 %v1244
    %v1246 = vpop.xlane.xlu0 %1245
    %v1247 = vrcp.pop %v1246
    %v1248 = vmul.f32 %v1243, %v1247
    %v1250 = vsel %vm953, %v1248, 0
    %1252 = vmatpush.msra.mxu0 0.0
    %1253 = vmatpush.msra.mxu0 0.0
    %1254 = vmatpush.msra.mxu0 0.0
    %1255 = vmatpush.msra.mxu0 0.0
    %1256 = vmatpush.msra.mxu0 0.0
    %1257 = vmatpush.msra.mxu0 0.0
    %1258 = vmatpush.msra.mxu0 0.0
    %1259 = vmatpush.msra.mxu0 0.0
    %1260 = vmatpush.msra.mxu0 0.0
    %1261 = vmatpush.msra.mxu0 0.0
    %1262 = vmatpush.msra.mxu0 0.0
    %1263 = vmatpush.msra.mxu0 0.0
    %1264 = vmatpush.msra.mxu0 0.0
    %1265 = vmatpush.msra.mxu0 0.0
    %1266 = vmatpush.msra.mxu0 %v883
    %1267 = vmatpush.msra.mxu0 %v881
    %1268 = vmatmul.f32.gmra.mxu0 %v1250
    %v1269 = vpop.f32.mrf.mxu0
    %v1270 = vadd.f32 0.0, %v1269
    %1271 = vdwg.mxu0
    %1272 = vrot.lane.b32.xlu0 %v323, 64
    %v1273 = vpop.permute.xlu0 %1272
    %1274 = vrot.lane.b32.xlu0 %v805, 64
    %v1275 = vpop.permute.xlu0 %1274
    %1276 = vrot.lane.b32.xlu0 %v807, 64
    %v1277 = vpop.permute.xlu0 %1276
    %v1278 = vsel %vm923, %v1273, 0
    %v1280 = vsel %vm923, %v1275, 0
    %v1282 = vsel %vm923, %v1277, 0
    %1284 = vmatpush.xpose.msra.mxu0 0.0
    %1285 = vmatpush.xpose.msra.mxu0 0.0
    %1286 = vmatpush.xpose.msra.mxu0 0.0
    %1287 = vmatpush.xpose.msra.mxu0 0.0
    %1288 = vmatpush.xpose.msra.mxu0 0.0
    %1289 = vmatpush.xpose.msra.mxu0 0.0
    %1290 = vmatpush.xpose.msra.mxu0 0.0
    %1291 = vmatpush.xpose.msra.mxu0 0.0
    %1292 = vmatpush.xpose.msra.mxu0 0.0
    %1293 = vmatpush.xpose.msra.mxu0 0.0
    %1294 = vmatpush.xpose.msra.mxu0 0.0
    %1295 = vmatpush.xpose.msra.mxu0 0.0
    %1296 = vmatpush.xpose.msra.mxu0 0.0
    %1297 = vmatpush.xpose.msra.mxu0 0.0
    %1298 = vmatpush.xpose.msra.mxu0 %v1282
    %1299 = vmatpush.xpose.msra.mxu0 %v1280
    %1300 = vmatmul.f32.gmra.mxu0 %v1278
    %v1301 = vpop.f32.mrf.mxu0
    %v1302 = vadd.f32 0.0, %v1301
    %1303 = vdwg.mxu0
    %v1304 = vsel %vm953, %v1302, -inf
    %1305 = vmax.xlane.f32.xlu0 %v1304
    %v1306 = vpop.xlane.xlu0 %1305
    %v1307 = vsub.f32 %v1302, %v1306
    %v1308 = vmul.f32 %v1307, 1.442695
    %v1309 = vpow.pop %v1308
    %v1310 = vsel %vm953, %v1309, 0.0
    %1311 = vadd.xlane.f32.xlu0 %v1310
    %v1312 = vpop.xlane.xlu0 %1311
    %v1313 = vrcp.pop %v1312
    %v1314 = vmul.f32 %v1309, %v1313
    %1317 = vrot.lane.b32.xlu0 %v881, 64
    %v1318 = vpop.permute.xlu0 %1317
    %1319 = vrot.lane.b32.xlu0 %v883, 64
    %v1320 = vpop.permute.xlu0 %1319
    %v1324 = vsel %vm953, %v1314, 0
    %1326 = vmatpush.msra.mxu0 0.0
    %1327 = vmatpush.msra.mxu0 0.0
    %1328 = vmatpush.msra.mxu0 0.0
    %1329 = vmatpush.msra.mxu0 0.0
    %1330 = vmatpush.msra.mxu0 0.0
    %1331 = vmatpush.msra.mxu0 0.0
    %1332 = vmatpush.msra.mxu0 0.0
    %1333 = vmatpush.msra.mxu0 0.0
    %1334 = vmatpush.msra.mxu0 0.0
    %1335 = vmatpush.msra.mxu0 0.0
    %1336 = vmatpush.msra.mxu0 0.0
    %1337 = vmatpush.msra.mxu0 0.0
    %1338 = vmatpush.msra.mxu0 0.0
    %1339 = vmatpush.msra.mxu0 0.0
    %1340 = vmatpush.msra.mxu0 %v1320
    %1341 = vmatpush.msra.mxu0 %v1318
    %1342 = vmatmul.f32.gmra.mxu0 %v1324
    %v1343 = vpop.f32.mrf.mxu0
    %v1344 = vadd.f32 0.0, %v1343
    %1345 = vdwg.mxu0
    %v1347 = vsel %vm923, %v351, 0
    %v1350 = vsel %vm923, %v843, 0
    %v1353 = vsel %vm923, %v845, 0
    %1355 = vmatpush.xpose.msra.mxu0 0.0
    %1356 = vmatpush.xpose.msra.mxu0 0.0
    %1357 = vmatpush.xpose.msra.mxu0 0.0
    %1358 = vmatpush.xpose.msra.mxu0 0.0
    %1359 = vmatpush.xpose.msra.mxu0 0.0
    %1360 = vmatpush.xpose.msra.mxu0 0.0
    %1361 = vmatpush.xpose.msra.mxu0 0.0
    %1362 = vmatpush.xpose.msra.mxu0 0.0
    %1363 = vmatpush.xpose.msra.mxu0 0.0
    %1364 = vmatpush.xpose.msra.mxu0 0.0
    %1365 = vmatpush.xpose.msra.mxu0 0.0
    %1366 = vmatpush.xpose.msra.mxu0 0.0
    %1367 = vmatpush.xpose.msra.mxu0 0.0
    %1368 = vmatpush.xpose.msra.mxu0 0.0
    %1369 = vmatpush.xpose.msra.mxu0 %v1353
    %1370 = vmatpush.xpose.msra.mxu0 %v1350
    %1371 = vmatmul.f32.gmra.mxu0 %v1347
    %v1372 = vpop.f32.mrf.mxu0
    %v1373 = vadd.f32 0.0, %v1372
    %1374 = vdwg.mxu0
    %v1375 = vsel %vm953, %v1373, -inf
    %1376 = vmax.xlane.f32.xlu0 %v1375
    %v1377 = vpop.xlane.xlu0 %1376
    %v1378 = vsub.f32 %v1373, %v1377
    %v1379 = vmul.f32 %v1378, 1.442695
    %v1380 = vpow.pop %v1379
    %v1381 = vsel %vm953, %v1380, 0.0
    %1382 = vadd.xlane.f32.xlu0 %v1381
    %v1383 = vpop.xlane.xlu0 %1382
    %v1384 = vrcp.pop %v1383
    %v1385 = vmul.f32 %v1380, %v1384
    %v1387 = vsel %vm953, %v1385, 0
    %1389 = vmatpush.msra.mxu0 0.0
    %1390 = vmatpush.msra.mxu0 0.0
    %1391 = vmatpush.msra.mxu0 0.0
    %1392 = vmatpush.msra.mxu0 0.0
    %1393 = vmatpush.msra.mxu0 0.0
    %1394 = vmatpush.msra.mxu0 0.0
    %1395 = vmatpush.msra.mxu0 0.0
    %1396 = vmatpush.msra.mxu0 0.0
    %1397 = vmatpush.msra.mxu0 0.0
    %1398 = vmatpush.msra.mxu0 0.0
    %1399 = vmatpush.msra.mxu0 0.0
    %1400 = vmatpush.msra.mxu0 0.0
    %1401 = vmatpush.msra.mxu0 0.0
    %1402 = vmatpush.msra.mxu0 0.0
    %1403 = vmatpush.msra.mxu0 %v921
    %1404 = vmatpush.msra.mxu0 %v919
    %1405 = vmatmul.f32.gmra.mxu0 %v1387
    %v1406 = vpop.f32.mrf.mxu0
    %v1407 = vadd.f32 0.0, %v1406
    %1408 = vdwg.mxu0
    %1409 = vrot.lane.b32.xlu0 %v351, 64
    %v1410 = vpop.permute.xlu0 %1409
    %1411 = vrot.lane.b32.xlu0 %v843, 64
    %v1412 = vpop.permute.xlu0 %1411
    %1413 = vrot.lane.b32.xlu0 %v845, 64
    %v1414 = vpop.permute.xlu0 %1413
    %v1415 = vsel %vm923, %v1410, 0
    %v1417 = vsel %vm923, %v1412, 0
    %v1419 = vsel %vm923, %v1414, 0
    %1421 = vmatpush.xpose.msra.mxu0 0.0
    %1422 = vmatpush.xpose.msra.mxu0 0.0
    %1423 = vmatpush.xpose.msra.mxu0 0.0
    %1424 = vmatpush.xpose.msra.mxu0 0.0
    %1425 = vmatpush.xpose.msra.mxu0 0.0
    %1426 = vmatpush.xpose.msra.mxu0 0.0
    %1427 = vmatpush.xpose.msra.mxu0 0.0
    %1428 = vmatpush.xpose.msra.mxu0 0.0
    %1429 = vmatpush.xpose.msra.mxu0 0.0
    %1430 = vmatpush.xpose.msra.mxu0 0.0
    %1431 = vmatpush.xpose.msra.mxu0 0.0
    %1432 = vmatpush.xpose.msra.mxu0 0.0
    %1433 = vmatpush.xpose.msra.mxu0 0.0
    %1434 = vmatpush.xpose.msra.mxu0 0.0
    %1435 = vmatpush.xpose.msra.mxu0 %v1419
    %1436 = vmatpush.xpose.msra.mxu0 %v1417
    %1437 = vmatmul.f32.gmra.mxu0 %v1415
    %v1438 = vpop.f32.mrf.mxu0
    %v1439 = vadd.f32 0.0, %v1438
    %1440 = vdwg.mxu0
    %v1441 = vsel %vm953, %v1439, -inf
    %1442 = vmax.xlane.f32.xlu0 %v1441
    %v1443 = vpop.xlane.xlu0 %1442
    %v1444 = vsub.f32 %v1439, %v1443
    %v1445 = vmul.f32 %v1444, 1.442695
    %v1446 = vpow.pop %v1445
    %v1447 = vsel %vm953, %v1446, 0.0
    %1448 = vadd.xlane.f32.xlu0 %v1447
    %v1449 = vpop.xlane.xlu0 %1448
    %v1450 = vrcp.pop %v1449
    %v1451 = vmul.f32 %v1446, %v1450
    %1454 = vrot.lane.b32.xlu0 %v919, 64
    %v1455 = vpop.permute.xlu0 %1454
    %1456 = vrot.lane.b32.xlu0 %v921, 64
    %v1457 = vpop.permute.xlu0 %1456
    %v1461 = vsel %vm953, %v1451, 0
    %1463 = vmatpush.msra.mxu0 0.0
    %1464 = vmatpush.msra.mxu0 0.0
    %1465 = vmatpush.msra.mxu0 0.0
    %1466 = vmatpush.msra.mxu0 0.0
    %1467 = vmatpush.msra.mxu0 0.0
    %1468 = vmatpush.msra.mxu0 0.0
    %1469 = vmatpush.msra.mxu0 0.0
    %1470 = vmatpush.msra.mxu0 0.0
    %1471 = vmatpush.msra.mxu0 0.0
    %1472 = vmatpush.msra.mxu0 0.0
    %1473 = vmatpush.msra.mxu0 0.0
    %1474 = vmatpush.msra.mxu0 0.0
    %1475 = vmatpush.msra.mxu0 0.0
    %1476 = vmatpush.msra.mxu0 0.0
    %1477 = vmatpush.msra.mxu0 %v1457
    %1478 = vmatpush.msra.mxu0 %v1455
    %1479 = vmatmul.f32.gmra.mxu0 %v1461
    %v1480 = vpop.f32.mrf.mxu0
    %v1481 = vadd.f32 0.0, %v1480
    %1482 = vdwg.mxu0
    %1484 = vrot.lane.b32.xlu0 %v1344, 64
    %v1485 = vpop.permute.xlu0 %1484
    %1488 = vrot.lane.b32.xlu0 %v1481, 64
    %v1489 = vpop.permute.xlu0 %1488
    %v1491 = vsel %vm923, %v1270, %v1485
    %v1492 = vsel %vm923, %v1407, %v1489
    %v1493 = vpack.c.bf16 %v1491, %v1207
    %v1494 = vpack.c.bf16 %v1492, %v1208
    %v1495 = vld [vmem:[#allocation6] sm:$0xff]
    %v1496 = vld [vmem:[#allocation6 + $0x8] sm:$0xff]
    %v1497 = vld [vmem:[#allocation6 + $0x10] sm:$0xff]
    %v1498 = vld [vmem:[#allocation6 + $0x18] sm:$0xff]
    %v1499 = vld [vmem:[#allocation6 + $0x20] sm:$0xff]
    %v1500 = vld [vmem:[#allocation6 + $0x28] sm:$0xff]
    %v1501 = vld [vmem:[#allocation6 + $0x30] sm:$0xff]
    %v1502 = vld [vmem:[#allocation6 + $0x38] sm:$0xff]
    %v1503 = vld [vmem:[#allocation6 + $0x40] sm:$0xff]
    %v1504 = vld [vmem:[#allocation6 + $0x48] sm:$0xff]
    %v1505 = vld [vmem:[#allocation6 + $0x50] sm:$0xff]
    %v1506 = vld [vmem:[#allocation6 + $0x58] sm:$0xff]
    %v1507 = vld [vmem:[#allocation6 + $0x60] sm:$0xff]
    %v1508 = vld [vmem:[#allocation6 + $0x68] sm:$0xff]
    %v1509 = vld [vmem:[#allocation6 + $0x70] sm:$0xff]
    %v1510 = vld [vmem:[#allocation6 + $0x78] sm:$0xff]
    %v1511 = vld [vmem:[#allocation6 + $0x80] sm:$0xff]
    %v1512 = vld [vmem:[#allocation6 + $0x88] sm:$0xff]
    %v1513 = vld [vmem:[#allocation6 + $0x90] sm:$0xff]
    %v1514 = vld [vmem:[#allocation6 + $0x98] sm:$0xff]
    %v1515 = vld [vmem:[#allocation6 + $0xa0] sm:$0xff]
    %v1516 = vld [vmem:[#allocation6 + $0xa8] sm:$0xff]
    %v1517 = vld [vmem:[#allocation6 + $0xb0] sm:$0xff]
    %v1518 = vld [vmem:[#allocation6 + $0xb8] sm:$0xff]
    %v1519 = vld [vmem:[#allocation6 + $0xc0] sm:$0xff]
    %v1520 = vld [vmem:[#allocation6 + $0xc8] sm:$0xff]
    %v1521 = vld [vmem:[#allocation6 + $0xd0] sm:$0xff]
    %v1522 = vld [vmem:[#allocation6 + $0xd8] sm:$0xff]
    %v1523 = vld [vmem:[#allocation6 + $0xe0] sm:$0xff]
    %v1524 = vld [vmem:[#allocation6 + $0xe8] sm:$0xff]
    %v1525 = vld [vmem:[#allocation6 + $0xf0] sm:$0xff]
    %v1526 = vld [vmem:[#allocation6 + $0xf8] sm:$0xff]
    %v1527 = vld [vmem:[%s8] sm:$0x3]
    %v1529 = vperm.slane %v1527, 0
    %v1530 = vperm.slane %v1527, 1
    %v1565 = vunpack.c.l.b16 %v1495
    %v1566 = vunpack.c.h.b16 %v1495
    %v1567 = vunpack.c.l.b16 %v1496
    %v1568 = vunpack.c.h.b16 %v1496
    %v1569 = vunpack.c.l.b16 %v1497
    %v1570 = vunpack.c.h.b16 %v1497
    %v1571 = vunpack.c.l.b16 %v1498
    %v1572 = vunpack.c.h.b16 %v1498
    %v1573 = vunpack.c.l.b16 %v1499
    %v1574 = vunpack.c.h.b16 %v1499
    %v1575 = vunpack.c.l.b16 %v1500
    %v1576 = vunpack.c.h.b16 %v1500
    %v1577 = vunpack.c.l.b16 %v1501
    %v1578 = vunpack.c.h.b16 %v1501
    %v1579 = vunpack.c.l.b16 %v1502
    %v1580 = vunpack.c.h.b16 %v1502
    %v1581 = vunpack.c.l.b16 %v1503
    %v1582 = vunpack.c.h.b16 %v1503
    %v1583 = vunpack.c.l.b16 %v1504
    %v1584 = vunpack.c.h.b16 %v1504
    %v1585 = vunpack.c.l.b16 %v1505
    %v1586 = vunpack.c.h.b16 %v1505
    %v1587 = vunpack.c.l.b16 %v1506
    %v1588 = vunpack.c.h.b16 %v1506
    %v1589 = vunpack.c.l.b16 %v1507
    %v1590 = vunpack.c.h.b16 %v1507
    %v1591 = vunpack.c.l.b16 %v1508
    %v1592 = vunpack.c.h.b16 %v1508
    %v1593 = vunpack.c.l.b16 %v1509
    %v1594 = vunpack.c.h.b16 %v1509
    %v1595 = vunpack.c.l.b16 %v1510
    %v1596 = vunpack.c.h.b16 %v1510
    %v1597 = vunpack.c.l.b16 %v1511
    %v1598 = vunpack.c.h.b16 %v1511
    %v1599 = vunpack.c.l.b16 %v1512
    %v1600 = vunpack.c.h.b16 %v1512
    %v1601 = vunpack.c.l.b16 %v1513
    %v1602 = vunpack.c.h.b16 %v1513
    %v1603 = vunpack.c.l.b16 %v1514
    %v1604 = vunpack.c.h.b16 %v1514
    %v1605 = vunpack.c.l.b16 %v1515
    %v1606 = vunpack.c.h.b16 %v1515
    %v1607 = vunpack.c.l.b16 %v1516
    %v1608 = vunpack.c.h.b16 %v1516
    %v1609 = vunpack.c.l.b16 %v1517
    %v1610 = vunpack.c.h.b16 %v1517
    %v1611 = vunpack.c.l.b16 %v1518
    %v1612 = vunpack.c.h.b16 %v1518
    %v1613 = vunpack.c.l.b16 %v1519
    %v1614 = vunpack.c.h.b16 %v1519
    %v1615 = vunpack.c.l.b16 %v1520
    %v1616 = vunpack.c.h.b16 %v1520
    %v1617 = vunpack.c.l.b16 %v1521
    %v1618 = vunpack.c.h.b16 %v1521
    %v1619 = vunpack.c.l.b16 %v1522
    %v1620 = vunpack.c.h.b16 %v1522
    %v1621 = vunpack.c.l.b16 %v1523
    %v1622 = vunpack.c.h.b16 %v1523
    %v1623 = vunpack.c.l.b16 %v1524
    %v1624 = vunpack.c.h.b16 %v1524
    %v1625 = vunpack.c.l.b16 %v1525
    %v1626 = vunpack.c.h.b16 %v1525
    %v1627 = vunpack.c.l.b16 %v1526
    %v1628 = vunpack.c.h.b16 %v1526
    %v1629 = vpack.c.b16 %v1567, %v1565
    %v1630 = vpack.c.b16 %v1568, %v1566
    %v1631 = vpack.c.b16 %v1571, %v1569
    %v1632 = vpack.c.b16 %v1572, %v1570
    %v1633 = vpack.c.b16 %v1575, %v1573
    %v1634 = vpack.c.b16 %v1576, %v1574
    %v1635 = vpack.c.b16 %v1579, %v1577
    %v1636 = vpack.c.b16 %v1580, %v1578
    %v1637 = vpack.c.b16 %v1583, %v1581
    %v1638 = vpack.c.b16 %v1584, %v1582
    %v1639 = vpack.c.b16 %v1587, %v1585
    %v1640 = vpack.c.b16 %v1588, %v1586
    %v1641 = vpack.c.b16 %v1591, %v1589
    %v1642 = vpack.c.b16 %v1592, %v1590
    %v1643 = vpack.c.b16 %v1595, %v1593
    %v1644 = vpack.c.b16 %v1596, %v1594
    %v1645 = vpack.c.b16 %v1599, %v1597
    %v1646 = vpack.c.b16 %v1600, %v1598
    %v1647 = vpack.c.b16 %v1603, %v1601
    %v1648 = vpack.c.b16 %v1604, %v1602
    %v1649 = vpack.c.b16 %v1607, %v1605
    %v1650 = vpack.c.b16 %v1608, %v1606
    %v1651 = vpack.c.b16 %v1611, %v1609
    %v1652 = vpack.c.b16 %v1612, %v1610
    %v1653 = vpack.c.b16 %v1615, %v1613
    %v1654 = vpack.c.b16 %v1616, %v1614
    %v1655 = vpack.c.b16 %v1619, %v1617
    %v1656 = vpack.c.b16 %v1620, %v1618
    %v1657 = vpack.c.b16 %v1623, %v1621
    %v1658 = vpack.c.b16 %v1624, %v1622
    %v1659 = vpack.c.b16 %v1627, %v1625
    %v1660 = vpack.c.b16 %v1628, %v1626
    %1693 = vmatpush.bf16.msra.mxu0 %v1643
    %1694 = vmatpush.bf16.msra.mxu0 %v1641
    %1695 = vmatpush.bf16.msra.mxu0 %v1639
    %1696 = vmatpush.bf16.msra.mxu0 %v1637
    %1697 = vmatpush.bf16.msra.mxu0 %v1635
    %1698 = vmatpush.bf16.msra.mxu0 %v1633
    %1699 = vmatpush.bf16.msra.mxu0 %v1631
    %1700 = vmatpush.bf16.msra.mxu0 %v1629
    %1701 = vmatmul.bf16.gmra.mxu0 %v1493
    %v1702 = vpop.f32.mrf.mxu0
    %v1703 = vadd.f32 %v1529, %v1702
    %v1704 = vpop.f32.mrf.mxu0
    %v1705 = vadd.f32 %v1529, %v1704
    %1706 = vdwg.mxu0
    %1707 = vmatpush.bf16.msra.mxu0 %v1659
    %1708 = vmatpush.bf16.msra.mxu0 %v1657
    %1709 = vmatpush.bf16.msra.mxu0 %v1655
    %1710 = vmatpush.bf16.msra.mxu0 %v1653
    %1711 = vmatpush.bf16.msra.mxu0 %v1651
    %1712 = vmatpush.bf16.msra.mxu0 %v1649
    %1713 = vmatpush.bf16.msra.mxu0 %v1647
    %1714 = vmatpush.bf16.msra.mxu0 %v1645
    %1715 = vmatmul.bf16.gmra.mxu0 %v1494
    %v1716 = vpop.f32.mrf.mxu0
    %v1717 = vadd.f32 %v1703, %v1716
    %v1718 = vpop.f32.mrf.mxu0
    %v1719 = vadd.f32 %v1705, %v1718
    %1720 = vdwg.mxu0
    %1721 = vmatpush.bf16.msra.mxu0 %v1644
    %1722 = vmatpush.bf16.msra.mxu0 %v1642
    %1723 = vmatpush.bf16.msra.mxu0 %v1640
    %1724 = vmatpush.bf16.msra.mxu0 %v1638
    %1725 = vmatpush.bf16.msra.mxu0 %v1636
    %1726 = vmatpush.bf16.msra.mxu0 %v1634
    %1727 = vmatpush.bf16.msra.mxu0 %v1632
    %1728 = vmatpush.bf16.msra.mxu0 %v1630
    %1729 = vmatmul.bf16.gmra.mxu0 %v1493
    %v1730 = vpop.f32.mrf.mxu0
    %v1731 = vadd.f32 %v1530, %v1730
    %v1732 = vpop.f32.mrf.mxu0
    %v1733 = vadd.f32 %v1530, %v1732
    %1734 = vdwg.mxu0
    %1735 = vmatpush.bf16.msra.mxu0 %v1660
    %1736 = vmatpush.bf16.msra.mxu0 %v1658
    %1737 = vmatpush.bf16.msra.mxu0 %v1656
    %1738 = vmatpush.bf16.msra.mxu0 %v1654
    %1739 = vmatpush.bf16.msra.mxu0 %v1652
    %1740 = vmatpush.bf16.msra.mxu0 %v1650
    %1741 = vmatpush.bf16.msra.mxu0 %v1648
    %1742 = vmatpush.bf16.msra.mxu0 %v1646
    %1743 = vmatmul.bf16.gmra.mxu0 %v1494
    %v1744 = vpop.f32.mrf.mxu0
    %v1745 = vadd.f32 %v1731, %v1744
    %v1746 = vpop.f32.mrf.mxu0
    %v1747 = vadd.f32 %v1733, %v1746
    %1748 = vdwg.mxu0
    %v1749 = vadd.f32 %v93, %v1717
    %v1750 = vadd.f32 %v94, %v1745
    %v1751 = vadd.f32 %v95, %v1719
    %v1752 = vadd.f32 %v96, %v1747
    %v1753 = vadd.f32 %v1749, %v1750
    %1754 = vadd.xlane.f32.xlu0 %v1753
    %v1755 = vpop.xlane.xlu0 %1754
    %v1756 = vadd.f32 %v1751, %v1752
    %1757 = vadd.xlane.f32.xlu0 %v1756
    %v1758 = vpop.xlane.xlu0 %1757
    %v1759 = vrcp.pop 256.0
    %v1760 = vmul.f32 256.0, %v1759
    %v1761 = vsub.f32 1.0, %v1760
    %v1762 = vmul.f32 %v1759, %v1761
    %v1763 = vadd.f32 %v1759, %v1762
    %vm1764 = vweird.f32 %v1759
    %v1765 = vsel %vm1764, %v1759, %v1763
    %v1766 = vmul.f32 %v1755, %v1765
    %v1767 = vmul.f32 %v1758, %v1765
    %v1768 = vsub.f32 %v1749, %v1766
    %v1769 = vsub.f32 %v1750, %v1766
    %v1770 = vsub.f32 %v1751, %v1767
    %v1771 = vsub.f32 %v1752, %v1767
    %v1772 = vmul.f32 %v1768, %v1768
    %v1773 = vmul.f32 %v1769, %v1769
    %v1774 = vmul.f32 %v1770, %v1770
    %v1775 = vmul.f32 %v1771, %v1771
    %v1776 = vadd.f32 %v1772, %v1773
    %1777 = vadd.xlane.f32.xlu0 %v1776
    %v1778 = vpop.xlane.xlu0 %1777
    %v1779 = vadd.f32 %v1774, %v1775
    %1780 = vadd.xlane.f32.xlu0 %v1779
    %v1781 = vpop.xlane.xlu0 %1780
    %v1782 = vmul.f32 %v1778, %v1765
    %v1783 = vmul.f32 %v1781, %v1765
    %v1784 = vadd.f32 %v1782, 1e-05
    %v1785 = vadd.f32 %v1783, 1e-05
    %v1786 = vrsqrt.pop %v1784
    %v1787 = vmul.f32 %v1786, %v1784
    %v1788 = vmul.f32 %v1787, %v1786
    %v1789 = vmul.f32 0.5, %v1788
    %v1790 = vsub.f32 1.5, %v1789
    %v1791 = vmul.f32 %v1786, %v1790
    %vm1792 = vweird.f32 %v1784
    %vm1793 = vweird.f32 %v1786
    %vm1794 = vmor %vm1792, %vm1793
    %v1795 = vsel %vm1794, %v1786, %v1791
    %v1796 = vrsqrt.pop %v1785
    %v1797 = vmul.f32 %v1796, %v1785
    %v1798 = vmul.f32 %v1797, %v1796
    %v1799 = vmul.f32 0.5, %v1798
    %v1800 = vsub.f32 1.5, %v1799
    %v1801 = vmul.f32 %v1796, %v1800
    %vm1802 = vweird.f32 %v1785
    %vm1803 = vweird.f32 %v1796
    %vm1804 = vmor %vm1802, %vm1803
    %v1805 = vsel %vm1804, %v1796, %v1801
    %v1806 = vmul.f32 %v1768, %v1795
    %v1807 = vmul.f32 %v1769, %v1795
    %v1808 = vmul.f32 %v1770, %v1805
    %v1809 = vmul.f32 %v1771, %v1805
    %v1810 = vld [vmem:[%s9] sm:$0x3]
    %v1812 = vperm.slane %v1810, 0
    %v1813 = vperm.slane %v1810, 1
    %v1816 = vmul.f32 %v1806, %v1812
    %v1817 = vmul.f32 %v1807, %v1813
    %v1818 = vmul.f32 %v1808, %v1812
    %v1819 = vmul.f32 %v1809, %v1813
    %v1820 = vld [vmem:[%s10] sm:$0x3]
    %v1822 = vperm.slane %v1820, 0
    %v1823 = vperm.slane %v1820, 1
    %v1826 = vadd.f32 %v1816, %v1822
    %v1827 = vadd.f32 %v1817, %v1823
    %v1828 = vadd.f32 %v1818, %v1822
    %v1829 = vadd.f32 %v1819, %v1823
    %1830 = vst [vmem:[%s11] sm:$0xff] %v1826
    %1831 = vst [vmem:[%s11 + $0x8] sm:$0xff] %v1827
    %1832 = vst [vmem:[%s11 + $0x10] sm:$0xff] %v1828
    %1833 = vst [vmem:[%s11 + $0x18] sm:$0xff] %v1829
    // Predicated region
    $region58: #{audio_video_inter_forward.1} parent=1 // pred_check
      _
    $region59: #{audio_video_inter_forward.1} parent=1 // pred_check_branch
      %1835 = sbr.rel (0) target = $region61
    $region60: #{audio_video_inter_forward.1} parent=1 // pred_region
      _
    $region61: #{audio_video_inter_forward.1} parent=1 // pred_fallthru
      _
    // Predicated region
    $region62: #{audio_video_inter_forward.1} parent=1 // pred_check
      _
    $region63: #{audio_video_inter_forward.1} parent=1 // pred_check_branch
      %1837 = sbr.rel (0) target = $region65
    $region64: #{audio_video_inter_forward.1} parent=1 // pred_region
      _
    $region65: #{audio_video_inter_forward.1} parent=1 // pred_fallthru
      _
    %1838 = vsyncpa [#allocation3], 1
    %1839 = vsyncpa [#allocation5], 1

</llo_original>
